<compile_context>
chip_gen: v7x
topology: tpu7x:2x2x1
jax: 0.10.0
libtpu: 0.0.40
codegen_flags: <defaults>
</compile_context>

<pallas_src>
import jax
import jax.numpy as jnp
from jax.experimental import pallas as pl
from jax.experimental.pallas import tpu as pltpu


def _rnn_fused_kernel(x_ref, wih_t_ref, whh_t_ref, b_ref, wfc_t_ref, bfc_ref,
                      fc_ref, hid_ref):
    B, T, I = x_ref.shape
    H = whh_t_ref.shape[0]

    # (1) Non-recurrent input projection for ALL timesteps in one MXU matmul.
    #     Bias (b_ih + b_hh) folded in here, outside the serial loop.
    x_flat = x_ref[...].reshape(B * T, I)                       # (B*T, I)
    p = jnp.dot(x_flat, wih_t_ref[...],
                preferred_element_type=jnp.float32) + b_ref[...]
    p = p.reshape(B, T, H)                                      # (B, T, H)

    # (2) Serial recurrence: only h @ W_hh^T and tanh are on the critical path.
    whh_t = whh_t_ref[...]                                      # (H, H), VMEM-resident
    h = jnp.tanh(p[:, 0, :])                                    # h_0 = 0 -> first step is just tanh(P_0)
    hs = [h]
    for t in range(1, T):                                       # T static -> unrolled at trace time
        h = jnp.tanh(p[:, t, :] +
                     jnp.dot(h, whh_t, preferred_element_type=jnp.float32))
        hs.append(h)

    hid_ref[...] = h[None].astype(hid_ref.dtype)                # (1, B, H)

    # (3) fc head on all timesteps at once (single lane-dense batched matmul,
    #     single output store instead of T masked 2-lane stores).
    out = jnp.stack(hs, axis=1).reshape(B * T, H)               # row order = b*T + t (matches .view(-1, H))
    fc = jnp.dot(out, wfc_t_ref[...],
                 preferred_element_type=jnp.float32) + bfc_ref[...]
    fc_ref[...] = fc.astype(fc_ref.dtype)


def rnn_forward(x, w_ih, w_hh, b_ih, b_hh, w_fc, b_fc):
    """x: (B, T, I) float32. Returns (fc_out (B*T, O), hidden (1, B, H))."""
    B, T, I = x.shape
    H = w_ih.shape[0]
    O = w_fc.shape[0]

    # Small weight-only transposes (activations are never transposed in HBM).
    wih_t = jnp.transpose(w_ih)                       # (I, H)
    whh_t = jnp.transpose(w_hh)                       # (H, H)
    b = (b_ih + b_hh).reshape(1, H)                   # fused bias, (1, H)
    wfc_t = jnp.transpose(w_fc)                       # (H, O)
    bfc = b_fc.reshape(1, O)                          # (1, O)

    grid_spec = pltpu.PrefetchScalarGridSpec(
        num_scalar_prefetch=0,
        grid=(1,),                                    # whole problem in VMEM; T loop is in-kernel
        in_specs=[
            pl.BlockSpec((B, T, I), lambda i: (0, 0, 0)),
            pl.BlockSpec((I, H), lambda i: (0, 0)),
            pl.BlockSpec((H, H), lambda i: (0, 0)),
            pl.BlockSpec((1, H), lambda i: (0, 0)),
            pl.BlockSpec((H, O), lambda i: (0, 0)),
            pl.BlockSpec((1, O), lambda i: (0, 0)),
        ],
        out_specs=[
            pl.BlockSpec((B * T, O), lambda i: (0, 0)),
            pl.BlockSpec((1, B, H), lambda i: (0, 0, 0)),
        ],
    )

    fc_out, hidden = pl.pallas_call(
        _rnn_fused_kernel,
        out_shape=(
            jax.ShapeDtypeStruct((B * T, O), jnp.float32),
            jax.ShapeDtypeStruct((1, B, H), jnp.float32),
        ),
        grid_spec=grid_spec,
        compiler_params=pltpu.CompilerParams(
            dimension_semantics=("arbitrary",)),      # single sequential step
    )(x, wih_t, whh_t, b, wfc_t, bfc)

    return fc_out, hidden


def _init_params(key, input_size, hidden_size, output_size):
    # Deterministic init, uniform(-1/sqrt(H), 1/sqrt(H)) like PyTorch defaults.
    ks = jax.random.split(key, 6)
    s = 1.0 / jnp.sqrt(hidden_size)
    w_ih = jax.random.uniform(ks[0], (hidden_size, input_size), jnp.float32, -s, s)
    w_hh = jax.random.uniform(ks[1], (hidden_size, hidden_size), jnp.float32, -s, s)
    b_ih = jax.random.uniform(ks[2], (hidden_size,), jnp.float32, -s, s)
    b_hh = jax.random.uniform(ks[3], (hidden_size,), jnp.float32, -s, s)
    w_fc = jax.random.uniform(ks[4], (output_size, hidden_size), jnp.float32, -s, s)
    b_fc = jax.random.uniform(ks[5], (output_size,), jnp.float32, -s, s)
    return w_ih, w_hh, b_ih, b_hh, w_fc, b_fc


def _reference(x, w_ih, w_hh, b_ih, b_hh, w_fc, b_fc):
    # Pure-JAX reference matching PyTorch nn.RNN(batch_first=True) + Linear.
    B, T, I = x.shape
    H = w_ih.shape[0]
    h = jnp.zeros((B, H), jnp.float32)
    outs = []
    for t in range(T):
        h = jnp.tanh(x[:, t, :] @ w_ih.T + b_ih + h @ w_hh.T + b_hh)
        outs.append(h)
    out = jnp.stack(outs, axis=1)                     # (B, T, H)
    fc = out.reshape(-1, H) @ w_fc.T + b_fc
    return fc, h[None]


if __name__ == "__main__":
    input_size, hidden_size, output_size = 10, 32, 2
    B, T = 16, 8                                      # module batch_size = 16

    key = jax.random.PRNGKey(0)
    kx, kp = jax.random.split(key)
    x = jax.random.normal(kx, (B, T, input_size), jnp.float32)
    params = _init_params(kp, input_size, hidden_size, output_size)

    fc_out, hidden = jax.block_until_ready(rnn_forward(x, *params))

    fc_ref, hidden_ref = _reference(x, *params)
    assert fc_out.shape == (B * T, output_size)
    assert hidden.shape == (1, B, hidden_size)
    assert jnp.allclose(fc_out, fc_ref, atol=1e-5, rtol=1e-5)
    assert jnp.allclose(hidden, hidden_ref, atol=1e-5, rtol=1e-5)

    print("KERNEL_OK")
</pallas_src>

<mosaic_0001>
module attributes {stable_mosaic.version = 11 : i64} {
  func.func @_rnn_fused_kernel(%arg0: i32, %arg1: memref<16x8x10xf32, #tpu.memory_space<vmem>>, %arg2: memref<10x32xf32, #tpu.memory_space<vmem>>, %arg3: memref<32x32xf32, #tpu.memory_space<vmem>>, %arg4: memref<1x32xf32, #tpu.memory_space<vmem>>, %arg5: memref<32x2xf32, #tpu.memory_space<vmem>>, %arg6: memref<1x2xf32, #tpu.memory_space<vmem>>, %arg7: memref<128x2xf32, #tpu.memory_space<vmem>>, %arg8: memref<1x16x32xf32, #tpu.memory_space<vmem>>) attributes {dimension_semantics = [#tpu.dimension_semantics<arbitrary>], iteration_bounds = array<i64: 1>, scalar_prefetch = 0 : i64, scratch_operands = 0 : i64, tpu.core_type = #tpu.core_type<tc>, window_params = [{pipeline_mode = #tpu.pipeline_mode<synchronous>, transform_indices = @transform_0, window_bounds = array<i64: 16, 8, 10>}, {pipeline_mode = #tpu.pipeline_mode<synchronous>, transform_indices = @transform_1, window_bounds = array<i64: 10, 32>}, {pipeline_mode = #tpu.pipeline_mode<synchronous>, transform_indices = @transform_2, window_bounds = array<i64: 32, 32>}, {pipeline_mode = #tpu.pipeline_mode<synchronous>, transform_indices = @transform_3, window_bounds = array<i64: 1, 32>}, {pipeline_mode = #tpu.pipeline_mode<synchronous>, transform_indices = @transform_4, window_bounds = array<i64: 32, 2>}, {pipeline_mode = #tpu.pipeline_mode<synchronous>, transform_indices = @transform_5, window_bounds = array<i64: 1, 2>}, {pipeline_mode = #tpu.pipeline_mode<synchronous>, transform_indices = @transform_6, window_bounds = array<i64: 128, 2>}, {pipeline_mode = #tpu.pipeline_mode<synchronous>, transform_indices = @transform_7, window_bounds = array<i64: 1, 16, 32>}]} {
    %c0 = arith.constant 0 : index
    %c0_0 = arith.constant 0 : index
    %c0_1 = arith.constant 0 : index
    %0 = vector.load %arg1[%c0, %c0_0, %c0_1] : memref<16x8x10xf32, #tpu.memory_space<vmem>>, vector<16x8x10xf32>
    %1 = vector.shape_cast %0 : vector<16x8x10xf32> to vector<128x10xf32>
    %c0_2 = arith.constant 0 : index
    %c0_3 = arith.constant 0 : index
    %2 = vector.load %arg2[%c0_2, %c0_3] : memref<10x32xf32, #tpu.memory_space<vmem>>, vector<10x32xf32>
    %cst = arith.constant dense<0.000000e+00> : vector<128x32xf32>
    %3 = tpu.matmul %1, %2, %cst {dimension_numbers = #tpu.dot_dimension_numbers<[1], [0], [0], [1], [0, 0, 1, 1], [], []>} : vector<128x10xf32>, vector<10x32xf32>, vector<128x32xf32> -> vector<128x32xf32>
    %c0_4 = arith.constant 0 : index
    %c0_5 = arith.constant 0 : index
    %4 = vector.load %arg4[%c0_4, %c0_5] : memref<1x32xf32, #tpu.memory_space<vmem>>, vector<1x32xf32>
    %5 = vector.broadcast %4 : vector<1x32xf32> to vector<128x32xf32>
    %6 = arith.addf %3, %5 : vector<128x32xf32>
    %7 = vector.shape_cast %6 : vector<128x32xf32> to vector<16x8x32xf32>
    %c0_6 = arith.constant 0 : index
    %c0_7 = arith.constant 0 : index
    %8 = vector.load %arg3[%c0_6, %c0_7] : memref<32x32xf32, #tpu.memory_space<vmem>>, vector<32x32xf32>
    %9 = vector.extract_strided_slice %7 {offsets = [0, 0, 0], sizes = [16, 1, 32], strides = [1, 1, 1]} : vector<16x8x32xf32> to vector<16x1x32xf32>
    %10 = vector.shape_cast %9 : vector<16x1x32xf32> to vector<16x32xf32>
    %11 = math.tanh %10 : vector<16x32xf32>
    %12 = vector.extract_strided_slice %7 {offsets = [0, 1, 0], sizes = [16, 1, 32], strides = [1, 1, 1]} : vector<16x8x32xf32> to vector<16x1x32xf32>
    %13 = vector.shape_cast %12 : vector<16x1x32xf32> to vector<16x32xf32>
    %cst_8 = arith.constant dense<0.000000e+00> : vector<16x32xf32>
    %14 = tpu.matmul %11, %8, %cst_8 {dimension_numbers = #tpu.dot_dimension_numbers<[1], [0], [0], [1], [0, 0, 1, 1], [], []>} : vector<16x32xf32>, vector<32x32xf32>, vector<16x32xf32> -> vector<16x32xf32>
    %15 = arith.addf %13, %14 : vector<16x32xf32>
    %16 = math.tanh %15 : vector<16x32xf32>
    %17 = vector.extract_strided_slice %7 {offsets = [0, 2, 0], sizes = [16, 1, 32], strides = [1, 1, 1]} : vector<16x8x32xf32> to vector<16x1x32xf32>
    %18 = vector.shape_cast %17 : vector<16x1x32xf32> to vector<16x32xf32>
    %cst_9 = arith.constant dense<0.000000e+00> : vector<16x32xf32>
    %19 = tpu.matmul %16, %8, %cst_9 {dimension_numbers = #tpu.dot_dimension_numbers<[1], [0], [0], [1], [0, 0, 1, 1], [], []>} : vector<16x32xf32>, vector<32x32xf32>, vector<16x32xf32> -> vector<16x32xf32>
    %20 = arith.addf %18, %19 : vector<16x32xf32>
    %21 = math.tanh %20 : vector<16x32xf32>
    %22 = vector.extract_strided_slice %7 {offsets = [0, 3, 0], sizes = [16, 1, 32], strides = [1, 1, 1]} : vector<16x8x32xf32> to vector<16x1x32xf32>
    %23 = vector.shape_cast %22 : vector<16x1x32xf32> to vector<16x32xf32>
    %cst_10 = arith.constant dense<0.000000e+00> : vector<16x32xf32>
    %24 = tpu.matmul %21, %8, %cst_10 {dimension_numbers = #tpu.dot_dimension_numbers<[1], [0], [0], [1], [0, 0, 1, 1], [], []>} : vector<16x32xf32>, vector<32x32xf32>, vector<16x32xf32> -> vector<16x32xf32>
    %25 = arith.addf %23, %24 : vector<16x32xf32>
    %26 = math.tanh %25 : vector<16x32xf32>
    %27 = vector.extract_strided_slice %7 {offsets = [0, 4, 0], sizes = [16, 1, 32], strides = [1, 1, 1]} : vector<16x8x32xf32> to vector<16x1x32xf32>
    %28 = vector.shape_cast %27 : vector<16x1x32xf32> to vector<16x32xf32>
    %cst_11 = arith.constant dense<0.000000e+00> : vector<16x32xf32>
    %29 = tpu.matmul %26, %8, %cst_11 {dimension_numbers = #tpu.dot_dimension_numbers<[1], [0], [0], [1], [0, 0, 1, 1], [], []>} : vector<16x32xf32>, vector<32x32xf32>, vector<16x32xf32> -> vector<16x32xf32>
    %30 = arith.addf %28, %29 : vector<16x32xf32>
    %31 = math.tanh %30 : vector<16x32xf32>
    %32 = vector.extract_strided_slice %7 {offsets = [0, 5, 0], sizes = [16, 1, 32], strides = [1, 1, 1]} : vector<16x8x32xf32> to vector<16x1x32xf32>
    %33 = vector.shape_cast %32 : vector<16x1x32xf32> to vector<16x32xf32>
    %cst_12 = arith.constant dense<0.000000e+00> : vector<16x32xf32>
    %34 = tpu.matmul %31, %8, %cst_12 {dimension_numbers = #tpu.dot_dimension_numbers<[1], [0], [0], [1], [0, 0, 1, 1], [], []>} : vector<16x32xf32>, vector<32x32xf32>, vector<16x32xf32> -> vector<16x32xf32>
    %35 = arith.addf %33, %34 : vector<16x32xf32>
    %36 = math.tanh %35 : vector<16x32xf32>
    %37 = vector.extract_strided_slice %7 {offsets = [0, 6, 0], sizes = [16, 1, 32], strides = [1, 1, 1]} : vector<16x8x32xf32> to vector<16x1x32xf32>
    %38 = vector.shape_cast %37 : vector<16x1x32xf32> to vector<16x32xf32>
    %cst_13 = arith.constant dense<0.000000e+00> : vector<16x32xf32>
    %39 = tpu.matmul %36, %8, %cst_13 {dimension_numbers = #tpu.dot_dimension_numbers<[1], [0], [0], [1], [0, 0, 1, 1], [], []>} : vector<16x32xf32>, vector<32x32xf32>, vector<16x32xf32> -> vector<16x32xf32>
    %40 = arith.addf %38, %39 : vector<16x32xf32>
    %41 = math.tanh %40 : vector<16x32xf32>
    %42 = vector.extract_strided_slice %7 {offsets = [0, 7, 0], sizes = [16, 1, 32], strides = [1, 1, 1]} : vector<16x8x32xf32> to vector<16x1x32xf32>
    %43 = vector.shape_cast %42 : vector<16x1x32xf32> to vector<16x32xf32>
    %cst_14 = arith.constant dense<0.000000e+00> : vector<16x32xf32>
    %44 = tpu.matmul %41, %8, %cst_14 {dimension_numbers = #tpu.dot_dimension_numbers<[1], [0], [0], [1], [0, 0, 1, 1], [], []>} : vector<16x32xf32>, vector<32x32xf32>, vector<16x32xf32> -> vector<16x32xf32>
    %45 = arith.addf %43, %44 : vector<16x32xf32>
    %46 = math.tanh %45 : vector<16x32xf32>
    %47 = vector.shape_cast %46 : vector<16x32xf32> to vector<1x16x32xf32>
    %c0_15 = arith.constant 0 : index
    %c0_16 = arith.constant 0 : index
    %c0_17 = arith.constant 0 : index
    %48 = vector.load %arg8[%c0_15, %c0_16, %c0_17] : memref<1x16x32xf32, #tpu.memory_space<vmem>>, vector<1x16x32xf32>
    tpu.vector_store %arg8[%c0_15, %c0_16, %c0_17], %47 {strides = array<i32>} : memref<1x16x32xf32, #tpu.memory_space<vmem>>, vector<1x16x32xf32>,
    %49 = vector.shape_cast %11 : vector<16x32xf32> to vector<16x1x32xf32>
    %50 = vector.shape_cast %16 : vector<16x32xf32> to vector<16x1x32xf32>
    %51 = vector.shape_cast %21 : vector<16x32xf32> to vector<16x1x32xf32>
    %52 = vector.shape_cast %26 : vector<16x32xf32> to vector<16x1x32xf32>
    %53 = vector.shape_cast %31 : vector<16x32xf32> to vector<16x1x32xf32>
    %54 = vector.shape_cast %36 : vector<16x32xf32> to vector<16x1x32xf32>
    %55 = vector.shape_cast %41 : vector<16x32xf32> to vector<16x1x32xf32>
    %56 = vector.shape_cast %46 : vector<16x32xf32> to vector<16x1x32xf32>
    %57 = tpu.concatenate %49, %50, %51, %52, %53, %54, %55, %56 in 1 : vector<16x1x32xf32>, vector<16x1x32xf32>, vector<16x1x32xf32>, vector<16x1x32xf32>, vector<16x1x32xf32>, vector<16x1x32xf32>, vector<16x1x32xf32>, vector<16x1x32xf32> -> vector<16x8x32xf32>
    %58 = vector.shape_cast %57 : vector<16x8x32xf32> to vector<128x32xf32>
    %c0_18 = arith.constant 0 : index
    %c0_19 = arith.constant 0 : index
    %59 = vector.load %arg5[%c0_18, %c0_19] : memref<32x2xf32, #tpu.memory_space<vmem>>, vector<32x2xf32>
    %cst_20 = arith.constant dense<0.000000e+00> : vector<128x2xf32>
    %60 = tpu.matmul %58, %59, %cst_20 {dimension_numbers = #tpu.dot_dimension_numbers<[1], [0], [0], [1], [0, 0, 1, 1], [], []>} : vector<128x32xf32>, vector<32x2xf32>, vector<128x2xf32> -> vector<128x2xf32>
    %c0_21 = arith.constant 0 : index
    %c0_22 = arith.constant 0 : index
    %61 = vector.load %arg6[%c0_21, %c0_22] : memref<1x2xf32, #tpu.memory_space<vmem>>, vector<1x2xf32>
    %62 = vector.broadcast %61 : vector<1x2xf32> to vector<128x2xf32>
    %63 = arith.addf %60, %62 : vector<128x2xf32>
    %c0_23 = arith.constant 0 : index
    %c0_24 = arith.constant 0 : index
    %64 = vector.load %arg7[%c0_23, %c0_24] : memref<128x2xf32, #tpu.memory_space<vmem>>, vector<128x2xf32>
    tpu.vector_store %arg7[%c0_23, %c0_24], %63 {strides = array<i32>} : memref<128x2xf32, #tpu.memory_space<vmem>>, vector<128x2xf32>,
    return
  }
  func.func @transform_0(%arg0: i32) -> (i32, i32, i32) {
    %c0_i32 = arith.constant 0 : i32
    %c0_i32_0 = arith.constant 0 : i32
    %c0_i32_1 = arith.constant 0 : i32
    %c0_i32_2 = arith.constant 0 : i32
    return %c0_i32, %c0_i32_0, %c0_i32_1 : i32, i32, i32
  }
  func.func @transform_1(%arg0: i32) -> (i32, i32) {
    %c0_i32 = arith.constant 0 : i32
    %c0_i32_0 = arith.constant 0 : i32
    %c0_i32_1 = arith.constant 0 : i32
    return %c0_i32, %c0_i32_0 : i32, i32
  }
  func.func @transform_2(%arg0: i32) -> (i32, i32) {
    %c0_i32 = arith.constant 0 : i32
    %c0_i32_0 = arith.constant 0 : i32
    %c0_i32_1 = arith.constant 0 : i32
    return %c0_i32, %c0_i32_0 : i32, i32
  }
  func.func @transform_3(%arg0: i32) -> (i32, i32) {
    %c0_i32 = arith.constant 0 : i32
    %c0_i32_0 = arith.constant 0 : i32
    %c0_i32_1 = arith.constant 0 : i32
    return %c0_i32, %c0_i32_0 : i32, i32
  }
  func.func @transform_4(%arg0: i32) -> (i32, i32) {
    %c0_i32 = arith.constant 0 : i32
    %c0_i32_0 = arith.constant 0 : i32
    %c0_i32_1 = arith.constant 0 : i32
    return %c0_i32, %c0_i32_0 : i32, i32
  }
  func.func @transform_5(%arg0: i32) -> (i32, i32) {
    %c0_i32 = arith.constant 0 : i32
    %c0_i32_0 = arith.constant 0 : i32
    %c0_i32_1 = arith.constant 0 : i32
    return %c0_i32, %c0_i32_0 : i32, i32
  }
  func.func @transform_6(%arg0: i32) -> (i32, i32) {
    %c0_i32 = arith.constant 0 : i32
    %c0_i32_0 = arith.constant 0 : i32
    %c0_i32_1 = arith.constant 0 : i32
    return %c0_i32, %c0_i32_0 : i32, i32
  }
  func.func @transform_7(%arg0: i32) -> (i32, i32, i32) {
    %c0_i32 = arith.constant 0 : i32
    %c0_i32_0 = arith.constant 0 : i32
    %c0_i32_1 = arith.constant 0 : i32
    %c0_i32_2 = arith.constant 0 : i32
    return %c0_i32, %c0_i32_0, %c0_i32_1 : i32, i32, i32
  }
}

</mosaic_0001>

<llo_original>
// kernel: tpu_custom_call.1
$region0: #{tpu_custom_call.1}
  #allocation0 [shape = 'u32[]', space=smem, size = 0x4, offset = 0x4, fixed_abs, tag = 'smem constant byte address 0x4 - core index']
  #allocation1 [shape = 'u32[144,128]{1,0:T(1,128)}', space=vmem, size = 0x12000, scoped, tag = 'internal scratch']
  %s0 = inlined_call_operand.vmem [shape: f32[16,8,10], index: 0, kind: input, shape index: {}]
  %s1 = inlined_call_operand.vmem [shape: f32[10,32], index: 1, kind: input, shape index: {}]
  %s2 = inlined_call_operand.vmem [shape: f32[32,32], index: 2, kind: input, shape index: {}]
  %s3 = inlined_call_operand.vmem [shape: f32[1,32], index: 3, kind: input, shape index: {}]
  %s4 = inlined_call_operand.vmem [shape: f32[32,2], index: 4, kind: input, shape index: {}]
  %s5 = inlined_call_operand.vmem [shape: f32[1,2], index: 5, kind: input, shape index: {}]
  %s6 = inlined_call_operand.vmem [shape: f32[128,2], index: 6, kind: output, shape index: {0}]
  %s7 = inlined_call_operand.hbm [shape: f32[1,16,32], index: 7, kind: output, shape index: {1}]
  %8 = xla_tuple %s6, %s7
  %s9 = sld [smem:[#allocation0]]
  $region42: #{tpu_custom_call.1} parent=0
    _
  %s11 = ssub.s32 1, %s9
  %s12 = scalar_select 0, %s11, %s9
  $region1: #{tpu_custom_call.1} parent=0
    #allocation2 [shape = 'u8[8192]{0}', space=vmem, size = 0x2000, scoped, tag = 'output window, operand 1, single buffered']
    #allocation3 [shape = 's32[1]{0}', space=sflag, size = 0x4, scoped, tag = 'scoped memory for tpu_custom_call.1']
    %13 = vsyncpa [#allocation3], 0
    // Predicated region
    $region2: #{tpu_custom_call.1} parent=1 // pred_check
      _
    $region3: #{tpu_custom_call.1} parent=1 // pred_check_branch
      %15 = sbr.rel (0) target = $region5
    $region4: #{tpu_custom_call.1} parent=1 // pred_region
      _
    $region5: #{tpu_custom_call.1} parent=1 // pred_fallthru
      _
    // Predicated region
    $region6: #{tpu_custom_call.1} parent=1 // pred_check
      _
    $region7: #{tpu_custom_call.1} parent=1 // pred_check_branch
      %17 = sbr.rel (0) target = $region9
    $region8: #{tpu_custom_call.1} parent=1 // pred_region
      _
    $region9: #{tpu_custom_call.1} parent=1 // pred_fallthru
      _
    // Predicated region
    $region10: #{tpu_custom_call.1} parent=1 // pred_check
      _
    $region11: #{tpu_custom_call.1} parent=1 // pred_check_branch
      %19 = sbr.rel (0) target = $region13
    $region12: #{tpu_custom_call.1} parent=1 // pred_region
      _
    $region13: #{tpu_custom_call.1} parent=1 // pred_fallthru
      _
    // Predicated region
    $region14: #{tpu_custom_call.1} parent=1 // pred_check
      _
    $region15: #{tpu_custom_call.1} parent=1 // pred_check_branch
      %21 = sbr.rel (0) target = $region17
    $region16: #{tpu_custom_call.1} parent=1 // pred_region
      _
    $region17: #{tpu_custom_call.1} parent=1 // pred_fallthru
      _
    // Predicated region
    $region18: #{tpu_custom_call.1} parent=1 // pred_check
      _
    $region19: #{tpu_custom_call.1} parent=1 // pred_check_branch
      %23 = sbr.rel (0) target = $region21
    $region20: #{tpu_custom_call.1} parent=1 // pred_region
      _
    $region21: #{tpu_custom_call.1} parent=1 // pred_fallthru
      _
    // Predicated region
    $region22: #{tpu_custom_call.1} parent=1 // pred_check
      _
    $region23: #{tpu_custom_call.1} parent=1 // pred_check_branch
      %25 = sbr.rel (0) target = $region25
    $region24: #{tpu_custom_call.1} parent=1 // pred_region
      _
    $region25: #{tpu_custom_call.1} parent=1 // pred_fallthru
      _
    %v26 = vld [vmem:[%s0] sm:$0xff]
    %v27 = vld [vmem:[%s0 + $0x8] sm:$0xff]
    %v28 = vld [vmem:[%s0 + $0x10] sm:$0xff]
    %v29 = vld [vmem:[%s0 + $0x18] sm:$0xff]
    %v30 = vld [vmem:[%s0 + $0x20] sm:$0xff]
    %v31 = vld [vmem:[%s0 + $0x28] sm:$0xff]
    %v32 = vld [vmem:[%s0 + $0x30] sm:$0xff]
    %v33 = vld [vmem:[%s0 + $0x38] sm:$0xff]
    %v34 = vld [vmem:[%s0 + $0x40] sm:$0xff]
    %v35 = vld [vmem:[%s0 + $0x48] sm:$0xff]
    %v36 = vld [vmem:[%s0 + $0x50] sm:$0xff]
    %v37 = vld [vmem:[%s0 + $0x58] sm:$0xff]
    %v38 = vld [vmem:[%s0 + $0x60] sm:$0xff]
    %v39 = vld [vmem:[%s0 + $0x68] sm:$0xff]
    %v40 = vld [vmem:[%s0 + $0x70] sm:$0xff]
    %v41 = vld [vmem:[%s0 + $0x78] sm:$0xff]
    %v42 = vld [vmem:[%s1] sm:$0xff]
    %v43 = vld [vmem:[%s1 + $0x8] sm:$0x3]
    %v44 = vld [vmem:[%s3] sm:$0x1]
    %v46 = vlaneseq
    %v47 = vshrl.u32 %v46, 7
    %v48 = vsub.s32 0, %v47
    %v49 = vrot.slane %v44, %v48
    %vm51 = vcmask 80896
    %v53 = vsel %vm51, %v26, 0
    %v56 = vsel %vm51, %v27, 0
    %v59 = vsel %vm51, %v28, 0
    %v62 = vsel %vm51, %v29, 0
    %v65 = vsel %vm51, %v30, 0
    %v68 = vsel %vm51, %v31, 0
    %v71 = vsel %vm51, %v32, 0
    %v74 = vsel %vm51, %v33, 0
    %v77 = vsel %vm51, %v34, 0
    %v80 = vsel %vm51, %v35, 0
    %v83 = vsel %vm51, %v36, 0
    %v86 = vsel %vm51, %v37, 0
    %v89 = vsel %vm51, %v38, 0
    %v92 = vsel %vm51, %v39, 0
    %v95 = vsel %vm51, %v40, 0
    %v98 = vsel %vm51, %v41, 0
    %vm100 = vcmask 1041408
    %v102 = vsel %vm100, %v43, 0
    %104 = vmatprep.subr.mxu0 0.0
    %105 = vmatpush1.msra.mxu0 %v42
    %106 = vmatprep.subr.mxu0 0.0
    %107 = vmatpush1.msra.mxu0 %v102
    %108 = vmatprep.subr.mxu0 0.0
    %109 = vmatpush1.msra.mxu0 0.0
    %110 = vmatprep.subr.mxu0 0.0
    %111 = vmatpush1.msra.mxu0 0.0
    %112 = vmatprep.subr.mxu0 0.0
    %113 = vmatpush1.msra.mxu0 0.0
    %114 = vmatprep.subr.mxu0 0.0
    %115 = vmatpush1.msra.mxu0 0.0
    %116 = vmatprep.subr.mxu0 0.0
    %117 = vmatpush1.msra.mxu0 0.0
    %118 = vmatprep.subr.mxu0 0.0
    %119 = vmatpush1.msra.mxu0 0.0
    %120 = vmatprep.subr.mxu0 0.0
    %121 = vmatpush1.msra.mxu0 0.0
    %122 = vmatprep.subr.mxu0 0.0
    %123 = vmatpush1.msra.mxu0 0.0
    %124 = vmatprep.subr.mxu0 0.0
    %125 = vmatpush1.msra.mxu0 0.0
    %126 = vmatprep.subr.mxu0 0.0
    %127 = vmatpush1.msra.mxu0 0.0
    %128 = vmatprep.subr.mxu0 0.0
    %129 = vmatpush1.msra.mxu0 0.0
    %130 = vmatprep.subr.mxu0 0.0
    %131 = vmatpush1.msra.mxu0 0.0
    %132 = vmatprep.subr.mxu0 0.0
    %133 = vmatpush1.msra.mxu0 0.0
    %134 = vmatprep.subr.mxu0 0.0
    %135 = vmatpush1.msra.mxu0 0.0
    %136 = vmatprep.subr.mxu0 0.0
    %137 = vmatpush1.msra.mxu0 0.0
    %138 = vmatprep.subr.mxu0 0.0
    %139 = vmatpush1.msra.mxu0 0.0
    %140 = vmatprep.subr.mxu0 0.0
    %141 = vmatpush1.msra.mxu0 0.0
    %142 = vmatprep.subr.mxu0 0.0
    %143 = vmatpush1.msra.mxu0 0.0
    %144 = vmatprep.subr.mxu0 0.0
    %145 = vmatpush1.msra.mxu0 0.0
    %146 = vmatprep.subr.mxu0 0.0
    %147 = vmatpush1.msra.mxu0 0.0
    %148 = vmatprep.subr.mxu0 0.0
    %149 = vmatpush1.msra.mxu0 0.0
    %150 = vmatprep.subr.mxu0 0.0
    %151 = vmatpush1.msra.mxu0 0.0
    %152 = vmatprep.subr.mxu0 0.0
    %153 = vmatpush1.msra.mxu0 0.0
    %154 = vmatprep.subr.mxu0 0.0
    %155 = vmatpush1.msra.mxu0 0.0
    %156 = vmatprep.subr.mxu0 0.0
    %157 = vmatpush1.msra.mxu0 0.0
    %158 = vmatprep.subr.mxu0 0.0
    %159 = vmatpush1.msra.mxu0 0.0
    %160 = vmatprep.subr.mxu0 0.0
    %161 = vmatpush1.msra.mxu0 0.0
    %162 = vmatprep.subr.mxu0 0.0
    %163 = vmatpush1.msra.mxu0 0.0
    %164 = vmatprep.subr.mxu0 0.0
    %165 = vmatpush1.msra.mxu0 0.0
    %166 = vmatprep.subr.mxu0 0.0
    %167 = vmatpush1.msra.mxu0 0.0
    %168 = vmatprep.mubr.f32.mxu0 0.0
    %169 = vmatmul.mubr.f32.gmra.mrb[0].mxu0 %v53
    %v170 = vpop.f32.mrb[0].mxu0
    %v171 = vadd.f32 %v49, %v170
    %v172 = vpop.f32.mrb[0].mxu0
    %173 = vmatprep.mubr.f32.mxu0 0.0
    %174 = vmatmul.mubr.f32.gmra.mrb[0].mxu0 %v56
    %v175 = vpop.f32.mrb[0].mxu0
    %v176 = vadd.f32 %v49, %v175
    %v177 = vpop.f32.mrb[0].mxu0
    %178 = vmatprep.mubr.f32.mxu0 0.0
    %179 = vmatmul.mubr.f32.gmra.mrb[0].mxu0 %v59
    %v180 = vpop.f32.mrb[0].mxu0
    %v181 = vadd.f32 %v49, %v180
    %v182 = vpop.f32.mrb[0].mxu0
    %183 = vmatprep.mubr.f32.mxu0 0.0
    %184 = vmatmul.mubr.f32.gmra.mrb[0].mxu0 %v62
    %v185 = vpop.f32.mrb[0].mxu0
    %v186 = vadd.f32 %v49, %v185
    %v187 = vpop.f32.mrb[0].mxu0
    %188 = vmatprep.mubr.f32.mxu0 0.0
    %189 = vmatmul.mubr.f32.gmra.mrb[0].mxu0 %v65
    %v190 = vpop.f32.mrb[0].mxu0
    %v191 = vadd.f32 %v49, %v190
    %v192 = vpop.f32.mrb[0].mxu0
    %193 = vmatprep.mubr.f32.mxu0 0.0
    %194 = vmatmul.mubr.f32.gmra.mrb[0].mxu0 %v68
    %v195 = vpop.f32.mrb[0].mxu0
    %v196 = vadd.f32 %v49, %v195
    %v197 = vpop.f32.mrb[0].mxu0
    %198 = vmatprep.mubr.f32.mxu0 0.0
    %199 = vmatmul.mubr.f32.gmra.mrb[0].mxu0 %v71
    %v200 = vpop.f32.mrb[0].mxu0
    %v201 = vadd.f32 %v49, %v200
    %v202 = vpop.f32.mrb[0].mxu0
    %203 = vmatprep.mubr.f32.mxu0 0.0
    %204 = vmatmul.mubr.f32.gmra.mrb[0].mxu0 %v74
    %v205 = vpop.f32.mrb[0].mxu0
    %v206 = vadd.f32 %v49, %v205
    %v207 = vpop.f32.mrb[0].mxu0
    %208 = vmatprep.mubr.f32.mxu0 0.0
    %209 = vmatmul.mubr.f32.gmra.mrb[0].mxu0 %v77
    %v210 = vpop.f32.mrb[0].mxu0
    %v211 = vadd.f32 %v49, %v210
    %v212 = vpop.f32.mrb[0].mxu0
    %213 = vmatprep.mubr.f32.mxu0 0.0
    %214 = vmatmul.mubr.f32.gmra.mrb[0].mxu0 %v80
    %v215 = vpop.f32.mrb[0].mxu0
    %v216 = vadd.f32 %v49, %v215
    %v217 = vpop.f32.mrb[0].mxu0
    %218 = vmatprep.mubr.f32.mxu0 0.0
    %219 = vmatmul.mubr.f32.gmra.mrb[0].mxu0 %v83
    %v220 = vpop.f32.mrb[0].mxu0
    %v221 = vadd.f32 %v49, %v220
    %v222 = vpop.f32.mrb[0].mxu0
    %223 = vmatprep.mubr.f32.mxu0 0.0
    %224 = vmatmul.mubr.f32.gmra.mrb[0].mxu0 %v86
    %v225 = vpop.f32.mrb[0].mxu0
    %v226 = vadd.f32 %v49, %v225
    %v227 = vpop.f32.mrb[0].mxu0
    %228 = vmatprep.mubr.f32.mxu0 0.0
    %229 = vmatmul.mubr.f32.gmra.mrb[0].mxu0 %v89
    %v230 = vpop.f32.mrb[0].mxu0
    %v231 = vadd.f32 %v49, %v230
    %v232 = vpop.f32.mrb[0].mxu0
    %233 = vmatprep.mubr.f32.mxu0 0.0
    %234 = vmatmul.mubr.f32.gmra.mrb[0].mxu0 %v92
    %v235 = vpop.f32.mrb[0].mxu0
    %v236 = vadd.f32 %v49, %v235
    %v237 = vpop.f32.mrb[0].mxu0
    %238 = vmatprep.mubr.f32.mxu0 0.0
    %239 = vmatmul.mubr.f32.gmra.mrb[0].mxu0 %v95
    %v240 = vpop.f32.mrb[0].mxu0
    %v241 = vadd.f32 %v49, %v240
    %v242 = vpop.f32.mrb[0].mxu0
    %243 = vmatprep.mubr.f32.mxu0 0.0
    %244 = vmatmul.mubr.f32.gmra.mrb[0].mxu0 %v98
    %v245 = vpop.f32.mrb[0].mxu0
    %v246 = vadd.f32 %v49, %v245
    %v247 = vpop.f32.mrb[0].mxu0
    %248 = vdwg.mxu0
    %v249 = vld [vmem:[%s2] sm:$0xff]
    %v250 = vld [vmem:[%s2 + $0x8] sm:$0xff]
    %v251 = vld [vmem:[%s2 + $0x10] sm:$0xff]
    %v252 = vld [vmem:[%s2 + $0x18] sm:$0xff]
    %v253 = vtanh.pop %v171
    %v254 = vtanh.pop %v176
    %v255 = vtanh.pop %v181
    %v256 = vtanh.pop %v186
    %v257 = vtanh.pop %v191
    %v258 = vtanh.pop %v196
    %v259 = vtanh.pop %v201
    %v260 = vtanh.pop %v206
    %v261 = vtanh.pop %v211
    %v262 = vtanh.pop %v216
    %v263 = vtanh.pop %v221
    %v264 = vtanh.pop %v226
    %v265 = vtanh.pop %v231
    %v266 = vtanh.pop %v236
    %v267 = vtanh.pop %v241
    %v268 = vtanh.pop %v246
    %v285 = vrot.slane %v254, 7
    %vm286 = vcmask 1041409
    %v287 = vsel %vm286, %v285, %v253
    %v288 = vrot.slane %v255, 6
    %vm289 = vcmask 1042434
    %v290 = vsel %vm289, %v288, %v287
    %v291 = vrot.slane %v256, 5
    %vm292 = vcmask 1043459
    %v293 = vsel %vm292, %v291, %v290
    %v294 = vrot.slane %v257, 4
    %vm295 = vcmask 1044484
    %v296 = vsel %vm295, %v294, %v293
    %v297 = vrot.slane %v258, 3
    %vm298 = vcmask 1045509
    %v299 = vsel %vm298, %v297, %v296
    %v300 = vrot.slane %v259, 2
    %vm301 = vcmask 1046534
    %v302 = vsel %vm301, %v300, %v299
    %v303 = vrot.slane %v260, 1
    %vm304 = vcmask 1047559
    %v305 = vsel %vm304, %v303, %v302
    %v306 = vrot.slane %v262, 7
    %v307 = vsel %vm286, %v306, %v261
    %v308 = vrot.slane %v263, 6
    %v309 = vsel %vm289, %v308, %v307
    %v310 = vrot.slane %v264, 5
    %v311 = vsel %vm292, %v310, %v309
    %v312 = vrot.slane %v265, 4
    %v313 = vsel %vm295, %v312, %v311
    %v314 = vrot.slane %v266, 3
    %v315 = vsel %vm298, %v314, %v313
    %v316 = vrot.slane %v267, 2
    %v317 = vsel %vm301, %v316, %v315
    %v318 = vrot.slane %v268, 1
    %v319 = vsel %vm304, %v318, %v317
    %vm320 = vcmask 261120
    %v321 = vsel %vm320, %v305, 0
    %v323 = vsel %vm320, %v319, 0
    %325 = vmatprep.subr.mxu0 0.0
    %326 = vmatpush1.msra.mxu0 %v249
    %327 = vmatprep.subr.mxu0 0.0
    %328 = vmatpush1.msra.mxu0 %v250
    %329 = vmatprep.subr.mxu0 0.0
    %330 = vmatpush1.msra.mxu0 %v251
    %331 = vmatprep.subr.mxu0 0.0
    %332 = vmatpush1.msra.mxu0 %v252
    %333 = vmatprep.subr.mxu0 0.0
    %334 = vmatpush1.msra.mxu0 0.0
    %335 = vmatprep.subr.mxu0 0.0
    %336 = vmatpush1.msra.mxu0 0.0
    %337 = vmatprep.subr.mxu0 0.0
    %338 = vmatpush1.msra.mxu0 0.0
    %339 = vmatprep.subr.mxu0 0.0
    %340 = vmatpush1.msra.mxu0 0.0
    %341 = vmatprep.subr.mxu0 0.0
    %342 = vmatpush1.msra.mxu0 0.0
    %343 = vmatprep.subr.mxu0 0.0
    %344 = vmatpush1.msra.mxu0 0.0
    %345 = vmatprep.subr.mxu0 0.0
    %346 = vmatpush1.msra.mxu0 0.0
    %347 = vmatprep.subr.mxu0 0.0
    %348 = vmatpush1.msra.mxu0 0.0
    %349 = vmatprep.subr.mxu0 0.0
    %350 = vmatpush1.msra.mxu0 0.0
    %351 = vmatprep.subr.mxu0 0.0
    %352 = vmatpush1.msra.mxu0 0.0
    %353 = vmatprep.subr.mxu0 0.0
    %354 = vmatpush1.msra.mxu0 0.0
    %355 = vmatprep.subr.mxu0 0.0
    %356 = vmatpush1.msra.mxu0 0.0
    %357 = vmatprep.subr.mxu0 0.0
    %358 = vmatpush1.msra.mxu0 0.0
    %359 = vmatprep.subr.mxu0 0.0
    %360 = vmatpush1.msra.mxu0 0.0
    %361 = vmatprep.subr.mxu0 0.0
    %362 = vmatpush1.msra.mxu0 0.0
    %363 = vmatprep.subr.mxu0 0.0
    %364 = vmatpush1.msra.mxu0 0.0
    %365 = vmatprep.subr.mxu0 0.0
    %366 = vmatpush1.msra.mxu0 0.0
    %367 = vmatprep.subr.mxu0 0.0
    %368 = vmatpush1.msra.mxu0 0.0
    %369 = vmatprep.subr.mxu0 0.0
    %370 = vmatpush1.msra.mxu0 0.0
    %371 = vmatprep.subr.mxu0 0.0
    %372 = vmatpush1.msra.mxu0 0.0
    %373 = vmatprep.subr.mxu0 0.0
    %374 = vmatpush1.msra.mxu0 0.0
    %375 = vmatprep.subr.mxu0 0.0
    %376 = vmatpush1.msra.mxu0 0.0
    %377 = vmatprep.subr.mxu0 0.0
    %378 = vmatpush1.msra.mxu0 0.0
    %379 = vmatprep.subr.mxu0 0.0
    %380 = vmatpush1.msra.mxu0 0.0
    %381 = vmatprep.subr.mxu0 0.0
    %382 = vmatpush1.msra.mxu0 0.0
    %383 = vmatprep.subr.mxu0 0.0
    %384 = vmatpush1.msra.mxu0 0.0
    %385 = vmatprep.subr.mxu0 0.0
    %386 = vmatpush1.msra.mxu0 0.0
    %387 = vmatprep.subr.mxu0 0.0
    %388 = vmatpush1.msra.mxu0 0.0
    %389 = vmatprep.mubr.f32.mxu0 0.0
    %390 = vmatmul.mubr.f32.gmra.mrb[0].mxu0 %v321
    %v391 = vpop.f32.mrb[0].mxu0
    %v392 = vadd.f32 0.0, %v391
    %v393 = vpop.f32.mrb[0].mxu0
    %394 = vmatprep.mubr.f32.mxu0 0.0
    %395 = vmatmul.mubr.f32.gmra.mrb[0].mxu0 %v323
    %v396 = vpop.f32.mrb[0].mxu0
    %v397 = vadd.f32 0.0, %v396
    %v398 = vpop.f32.mrb[0].mxu0
    %399 = vdwg.mxu0
    %v402 = vrot.slane %v392, 7
    %v403 = vrot.slane %v392, 1
    %v404 = vrot.slane %v392, 2
    %v405 = vrot.slane %v392, 3
    %v406 = vrot.slane %v392, 4
    %v407 = vrot.slane %v392, 5
    %v408 = vrot.slane %v392, 6
    %v409 = vrot.slane %v397, 7
    %v410 = vrot.slane %v397, 1
    %v411 = vrot.slane %v397, 2
    %v412 = vrot.slane %v397, 3
    %v413 = vrot.slane %v397, 4
    %v414 = vrot.slane %v397, 5
    %v415 = vrot.slane %v397, 6
    %v432 = vadd.f32 %v171, %v402
    %v433 = vadd.f32 %v176, %v392
    %v434 = vadd.f32 %v181, %v403
    %v435 = vadd.f32 %v186, %v404
    %v436 = vadd.f32 %v191, %v405
    %v437 = vadd.f32 %v196, %v406
    %v438 = vadd.f32 %v201, %v407
    %v439 = vadd.f32 %v206, %v408
    %v440 = vadd.f32 %v211, %v409
    %v441 = vadd.f32 %v216, %v397
    %v442 = vadd.f32 %v221, %v410
    %v443 = vadd.f32 %v226, %v411
    %v444 = vadd.f32 %v231, %v412
    %v445 = vadd.f32 %v236, %v413
    %v446 = vadd.f32 %v241, %v414
    %v447 = vadd.f32 %v246, %v415
    %v448 = vtanh.pop %v432
    %v449 = vtanh.pop %v433
    %v450 = vtanh.pop %v434
    %v451 = vtanh.pop %v435
    %v452 = vtanh.pop %v436
    %v453 = vtanh.pop %v437
    %v454 = vtanh.pop %v438
    %v455 = vtanh.pop %v439
    %v456 = vtanh.pop %v440
    %v457 = vtanh.pop %v441
    %v458 = vtanh.pop %v442
    %v459 = vtanh.pop %v443
    %v460 = vtanh.pop %v444
    %v461 = vtanh.pop %v445
    %v462 = vtanh.pop %v446
    %v463 = vtanh.pop %v447
    %v480 = vrot.slane %v448, 1
    %v481 = vsel %vm286, %v449, %v480
    %v482 = vrot.slane %v450, 7
    %v483 = vsel %vm289, %v482, %v481
    %v484 = vrot.slane %v451, 6
    %v485 = vsel %vm292, %v484, %v483
    %v486 = vrot.slane %v452, 5
    %v487 = vsel %vm295, %v486, %v485
    %v488 = vrot.slane %v453, 4
    %v489 = vsel %vm298, %v488, %v487
    %v490 = vrot.slane %v454, 3
    %v491 = vsel %vm301, %v490, %v489
    %v492 = vrot.slane %v455, 2
    %v493 = vsel %vm304, %v492, %v491
    %v494 = vrot.slane %v456, 1
    %v495 = vsel %vm286, %v457, %v494
    %v496 = vrot.slane %v458, 7
    %v497 = vsel %vm289, %v496, %v495
    %v498 = vrot.slane %v459, 6
    %v499 = vsel %vm292, %v498, %v497
    %v500 = vrot.slane %v460, 5
    %v501 = vsel %vm295, %v500, %v499
    %v502 = vrot.slane %v461, 4
    %v503 = vsel %vm298, %v502, %v501
    %v504 = vrot.slane %v462, 3
    %v505 = vsel %vm301, %v504, %v503
    %v506 = vrot.slane %v463, 2
    %v507 = vsel %vm304, %v506, %v505
    %v508 = vsel %vm320, %v493, 0
    %v510 = vsel %vm320, %v507, 0
    %512 = vmatprep.subr.mxu0 0.0
    %513 = vmatpush1.msra.mxu0 %v249
    %514 = vmatprep.subr.mxu0 0.0
    %515 = vmatpush1.msra.mxu0 %v250
    %516 = vmatprep.subr.mxu0 0.0
    %517 = vmatpush1.msra.mxu0 %v251
    %518 = vmatprep.subr.mxu0 0.0
    %519 = vmatpush1.msra.mxu0 %v252
    %520 = vmatprep.subr.mxu0 0.0
    %521 = vmatpush1.msra.mxu0 0.0
    %522 = vmatprep.subr.mxu0 0.0
    %523 = vmatpush1.msra.mxu0 0.0
    %524 = vmatprep.subr.mxu0 0.0
    %525 = vmatpush1.msra.mxu0 0.0
    %526 = vmatprep.subr.mxu0 0.0
    %527 = vmatpush1.msra.mxu0 0.0
    %528 = vmatprep.subr.mxu0 0.0
    %529 = vmatpush1.msra.mxu0 0.0
    %530 = vmatprep.subr.mxu0 0.0
    %531 = vmatpush1.msra.mxu0 0.0
    %532 = vmatprep.subr.mxu0 0.0
    %533 = vmatpush1.msra.mxu0 0.0
    %534 = vmatprep.subr.mxu0 0.0
    %535 = vmatpush1.msra.mxu0 0.0
    %536 = vmatprep.subr.mxu0 0.0
    %537 = vmatpush1.msra.mxu0 0.0
    %538 = vmatprep.subr.mxu0 0.0
    %539 = vmatpush1.msra.mxu0 0.0
    %540 = vmatprep.subr.mxu0 0.0
    %541 = vmatpush1.msra.mxu0 0.0
    %542 = vmatprep.subr.mxu0 0.0
    %543 = vmatpush1.msra.mxu0 0.0
    %544 = vmatprep.subr.mxu0 0.0
    %545 = vmatpush1.msra.mxu0 0.0
    %546 = vmatprep.subr.mxu0 0.0
    %547 = vmatpush1.msra.mxu0 0.0
    %548 = vmatprep.subr.mxu0 0.0
    %549 = vmatpush1.msra.mxu0 0.0
    %550 = vmatprep.subr.mxu0 0.0
    %551 = vmatpush1.msra.mxu0 0.0
    %552 = vmatprep.subr.mxu0 0.0
    %553 = vmatpush1.msra.mxu0 0.0
    %554 = vmatprep.subr.mxu0 0.0
    %555 = vmatpush1.msra.mxu0 0.0
    %556 = vmatprep.subr.mxu0 0.0
    %557 = vmatpush1.msra.mxu0 0.0
    %558 = vmatprep.subr.mxu0 0.0
    %559 = vmatpush1.msra.mxu0 0.0
    %560 = vmatprep.subr.mxu0 0.0
    %561 = vmatpush1.msra.mxu0 0.0
    %562 = vmatprep.subr.mxu0 0.0
    %563 = vmatpush1.msra.mxu0 0.0
    %564 = vmatprep.subr.mxu0 0.0
    %565 = vmatpush1.msra.mxu0 0.0
    %566 = vmatprep.subr.mxu0 0.0
    %567 = vmatpush1.msra.mxu0 0.0
    %568 = vmatprep.subr.mxu0 0.0
    %569 = vmatpush1.msra.mxu0 0.0
    %570 = vmatprep.subr.mxu0 0.0
    %571 = vmatpush1.msra.mxu0 0.0
    %572 = vmatprep.subr.mxu0 0.0
    %573 = vmatpush1.msra.mxu0 0.0
    %574 = vmatprep.subr.mxu0 0.0
    %575 = vmatpush1.msra.mxu0 0.0
    %576 = vmatprep.mubr.f32.mxu0 0.0
    %577 = vmatmul.mubr.f32.gmra.mrb[0].mxu0 %v508
    %v578 = vpop.f32.mrb[0].mxu0
    %v579 = vadd.f32 0.0, %v578
    %v580 = vpop.f32.mrb[0].mxu0
    %581 = vmatprep.mubr.f32.mxu0 0.0
    %582 = vmatmul.mubr.f32.gmra.mrb[0].mxu0 %v510
    %v583 = vpop.f32.mrb[0].mxu0
    %v584 = vadd.f32 0.0, %v583
    %v585 = vpop.f32.mrb[0].mxu0
    %586 = vdwg.mxu0
    %v589 = vrot.slane %v579, 6
    %v590 = vrot.slane %v579, 7
    %v591 = vrot.slane %v579, 1
    %v592 = vrot.slane %v579, 2
    %v593 = vrot.slane %v579, 3
    %v594 = vrot.slane %v579, 4
    %v595 = vrot.slane %v579, 5
    %v596 = vrot.slane %v584, 6
    %v597 = vrot.slane %v584, 7
    %v598 = vrot.slane %v584, 1
    %v599 = vrot.slane %v584, 2
    %v600 = vrot.slane %v584, 3
    %v601 = vrot.slane %v584, 4
    %v602 = vrot.slane %v584, 5
    %v619 = vadd.f32 %v171, %v589
    %v620 = vadd.f32 %v176, %v590
    %v621 = vadd.f32 %v181, %v579
    %v622 = vadd.f32 %v186, %v591
    %v623 = vadd.f32 %v191, %v592
    %v624 = vadd.f32 %v196, %v593
    %v625 = vadd.f32 %v201, %v594
    %v626 = vadd.f32 %v206, %v595
    %v627 = vadd.f32 %v211, %v596
    %v628 = vadd.f32 %v216, %v597
    %v629 = vadd.f32 %v221, %v584
    %v630 = vadd.f32 %v226, %v598
    %v631 = vadd.f32 %v231, %v599
    %v632 = vadd.f32 %v236, %v600
    %v633 = vadd.f32 %v241, %v601
    %v634 = vadd.f32 %v246, %v602
    %v635 = vtanh.pop %v619
    %v636 = vtanh.pop %v620
    %v637 = vtanh.pop %v621
    %v638 = vtanh.pop %v622
    %v639 = vtanh.pop %v623
    %v640 = vtanh.pop %v624
    %v641 = vtanh.pop %v625
    %v642 = vtanh.pop %v626
    %v643 = vtanh.pop %v627
    %v644 = vtanh.pop %v628
    %v645 = vtanh.pop %v629
    %v646 = vtanh.pop %v630
    %v647 = vtanh.pop %v631
    %v648 = vtanh.pop %v632
    %v649 = vtanh.pop %v633
    %v650 = vtanh.pop %v634
    %v667 = vrot.slane %v635, 2
    %v668 = vrot.slane %v636, 1
    %v669 = vsel %vm286, %v668, %v667
    %v670 = vsel %vm289, %v637, %v669
    %v671 = vrot.slane %v638, 7
    %v672 = vsel %vm292, %v671, %v670
    %v673 = vrot.slane %v639, 6
    %v674 = vsel %vm295, %v673, %v672
    %v675 = vrot.slane %v640, 5
    %v676 = vsel %vm298, %v675, %v674
    %v677 = vrot.slane %v641, 4
    %v678 = vsel %vm301, %v677, %v676
    %v679 = vrot.slane %v642, 3
    %v680 = vsel %vm304, %v679, %v678
    %v681 = vrot.slane %v643, 2
    %v682 = vrot.slane %v644, 1
    %v683 = vsel %vm286, %v682, %v681
    %v684 = vsel %vm289, %v645, %v683
    %v685 = vrot.slane %v646, 7
    %v686 = vsel %vm292, %v685, %v684
    %v687 = vrot.slane %v647, 6
    %v688 = vsel %vm295, %v687, %v686
    %v689 = vrot.slane %v648, 5
    %v690 = vsel %vm298, %v689, %v688
    %v691 = vrot.slane %v649, 4
    %v692 = vsel %vm301, %v691, %v690
    %v693 = vrot.slane %v650, 3
    %v694 = vsel %vm304, %v693, %v692
    %v695 = vsel %vm320, %v680, 0
    %v697 = vsel %vm320, %v694, 0
    %699 = vmatprep.subr.mxu0 0.0
    %700 = vmatpush1.msra.mxu0 %v249
    %701 = vmatprep.subr.mxu0 0.0
    %702 = vmatpush1.msra.mxu0 %v250
    %703 = vmatprep.subr.mxu0 0.0
    %704 = vmatpush1.msra.mxu0 %v251
    %705 = vmatprep.subr.mxu0 0.0
    %706 = vmatpush1.msra.mxu0 %v252
    %707 = vmatprep.subr.mxu0 0.0
    %708 = vmatpush1.msra.mxu0 0.0
    %709 = vmatprep.subr.mxu0 0.0
    %710 = vmatpush1.msra.mxu0 0.0
    %711 = vmatprep.subr.mxu0 0.0
    %712 = vmatpush1.msra.mxu0 0.0
    %713 = vmatprep.subr.mxu0 0.0
    %714 = vmatpush1.msra.mxu0 0.0
    %715 = vmatprep.subr.mxu0 0.0
    %716 = vmatpush1.msra.mxu0 0.0
    %717 = vmatprep.subr.mxu0 0.0
    %718 = vmatpush1.msra.mxu0 0.0
    %719 = vmatprep.subr.mxu0 0.0
    %720 = vmatpush1.msra.mxu0 0.0
    %721 = vmatprep.subr.mxu0 0.0
    %722 = vmatpush1.msra.mxu0 0.0
    %723 = vmatprep.subr.mxu0 0.0
    %724 = vmatpush1.msra.mxu0 0.0
    %725 = vmatprep.subr.mxu0 0.0
    %726 = vmatpush1.msra.mxu0 0.0
    %727 = vmatprep.subr.mxu0 0.0
    %728 = vmatpush1.msra.mxu0 0.0
    %729 = vmatprep.subr.mxu0 0.0
    %730 = vmatpush1.msra.mxu0 0.0
    %731 = vmatprep.subr.mxu0 0.0
    %732 = vmatpush1.msra.mxu0 0.0
    %733 = vmatprep.subr.mxu0 0.0
    %734 = vmatpush1.msra.mxu0 0.0
    %735 = vmatprep.subr.mxu0 0.0
    %736 = vmatpush1.msra.mxu0 0.0
    %737 = vmatprep.subr.mxu0 0.0
    %738 = vmatpush1.msra.mxu0 0.0
    %739 = vmatprep.subr.mxu0 0.0
    %740 = vmatpush1.msra.mxu0 0.0
    %741 = vmatprep.subr.mxu0 0.0
    %742 = vmatpush1.msra.mxu0 0.0
    %743 = vmatprep.subr.mxu0 0.0
    %744 = vmatpush1.msra.mxu0 0.0
    %745 = vmatprep.subr.mxu0 0.0
    %746 = vmatpush1.msra.mxu0 0.0
    %747 = vmatprep.subr.mxu0 0.0
    %748 = vmatpush1.msra.mxu0 0.0
    %749 = vmatprep.subr.mxu0 0.0
    %750 = vmatpush1.msra.mxu0 0.0
    %751 = vmatprep.subr.mxu0 0.0
    %752 = vmatpush1.msra.mxu0 0.0
    %753 = vmatprep.subr.mxu0 0.0
    %754 = vmatpush1.msra.mxu0 0.0
    %755 = vmatprep.subr.mxu0 0.0
    %756 = vmatpush1.msra.mxu0 0.0
    %757 = vmatprep.subr.mxu0 0.0
    %758 = vmatpush1.msra.mxu0 0.0
    %759 = vmatprep.subr.mxu0 0.0
    %760 = vmatpush1.msra.mxu0 0.0
    %761 = vmatprep.subr.mxu0 0.0
    %762 = vmatpush1.msra.mxu0 0.0
    %763 = vmatprep.mubr.f32.mxu0 0.0
    %764 = vmatmul.mubr.f32.gmra.mrb[0].mxu0 %v695
    %v765 = vpop.f32.mrb[0].mxu0
    %v766 = vadd.f32 0.0, %v765
    %v767 = vpop.f32.mrb[0].mxu0
    %768 = vmatprep.mubr.f32.mxu0 0.0
    %769 = vmatmul.mubr.f32.gmra.mrb[0].mxu0 %v697
    %v770 = vpop.f32.mrb[0].mxu0
    %v771 = vadd.f32 0.0, %v770
    %v772 = vpop.f32.mrb[0].mxu0
    %773 = vdwg.mxu0
    %v776 = vrot.slane %v766, 5
    %v777 = vrot.slane %v766, 6
    %v778 = vrot.slane %v766, 7
    %v779 = vrot.slane %v766, 1
    %v780 = vrot.slane %v766, 2
    %v781 = vrot.slane %v766, 3
    %v782 = vrot.slane %v766, 4
    %v783 = vrot.slane %v771, 5
    %v784 = vrot.slane %v771, 6
    %v785 = vrot.slane %v771, 7
    %v786 = vrot.slane %v771, 1
    %v787 = vrot.slane %v771, 2
    %v788 = vrot.slane %v771, 3
    %v789 = vrot.slane %v771, 4
    %v806 = vadd.f32 %v171, %v776
    %v807 = vadd.f32 %v176, %v777
    %v808 = vadd.f32 %v181, %v778
    %v809 = vadd.f32 %v186, %v766
    %v810 = vadd.f32 %v191, %v779
    %v811 = vadd.f32 %v196, %v780
    %v812 = vadd.f32 %v201, %v781
    %v813 = vadd.f32 %v206, %v782
    %v814 = vadd.f32 %v211, %v783
    %v815 = vadd.f32 %v216, %v784
    %v816 = vadd.f32 %v221, %v785
    %v817 = vadd.f32 %v226, %v771
    %v818 = vadd.f32 %v231, %v786
    %v819 = vadd.f32 %v236, %v787
    %v820 = vadd.f32 %v241, %v788
    %v821 = vadd.f32 %v246, %v789
    %v822 = vtanh.pop %v806
    %v823 = vtanh.pop %v807
    %v824 = vtanh.pop %v808
    %v825 = vtanh.pop %v809
    %v826 = vtanh.pop %v810
    %v827 = vtanh.pop %v811
    %v828 = vtanh.pop %v812
    %v829 = vtanh.pop %v813
    %v830 = vtanh.pop %v814
    %v831 = vtanh.pop %v815
    %v832 = vtanh.pop %v816
    %v833 = vtanh.pop %v817
    %v834 = vtanh.pop %v818
    %v835 = vtanh.pop %v819
    %v836 = vtanh.pop %v820
    %v837 = vtanh.pop %v821
    %v854 = vrot.slane %v822, 3
    %v855 = vrot.slane %v823, 2
    %v856 = vsel %vm286, %v855, %v854
    %v857 = vrot.slane %v824, 1
    %v858 = vsel %vm289, %v857, %v856
    %v859 = vsel %vm292, %v825, %v858
    %v860 = vrot.slane %v826, 7
    %v861 = vsel %vm295, %v860, %v859
    %v862 = vrot.slane %v827, 6
    %v863 = vsel %vm298, %v862, %v861
    %v864 = vrot.slane %v828, 5
    %v865 = vsel %vm301, %v864, %v863
    %v866 = vrot.slane %v829, 4
    %v867 = vsel %vm304, %v866, %v865
    %v868 = vrot.slane %v830, 3
    %v869 = vrot.slane %v831, 2
    %v870 = vsel %vm286, %v869, %v868
    %v871 = vrot.slane %v832, 1
    %v872 = vsel %vm289, %v871, %v870
    %v873 = vsel %vm292, %v833, %v872
    %v874 = vrot.slane %v834, 7
    %v875 = vsel %vm295, %v874, %v873
    %v876 = vrot.slane %v835, 6
    %v877 = vsel %vm298, %v876, %v875
    %v878 = vrot.slane %v836, 5
    %v879 = vsel %vm301, %v878, %v877
    %v880 = vrot.slane %v837, 4
    %v881 = vsel %vm304, %v880, %v879
    %v882 = vsel %vm320, %v867, 0
    %v884 = vsel %vm320, %v881, 0
    %886 = vmatprep.subr.mxu0 0.0
    %887 = vmatpush1.msra.mxu0 %v249
    %888 = vmatprep.subr.mxu0 0.0
    %889 = vmatpush1.msra.mxu0 %v250
    %890 = vmatprep.subr.mxu0 0.0
    %891 = vmatpush1.msra.mxu0 %v251
    %892 = vmatprep.subr.mxu0 0.0
    %893 = vmatpush1.msra.mxu0 %v252
    %894 = vmatprep.subr.mxu0 0.0
    %895 = vmatpush1.msra.mxu0 0.0
    %896 = vmatprep.subr.mxu0 0.0
    %897 = vmatpush1.msra.mxu0 0.0
    %898 = vmatprep.subr.mxu0 0.0
    %899 = vmatpush1.msra.mxu0 0.0
    %900 = vmatprep.subr.mxu0 0.0
    %901 = vmatpush1.msra.mxu0 0.0
    %902 = vmatprep.subr.mxu0 0.0
    %903 = vmatpush1.msra.mxu0 0.0
    %904 = vmatprep.subr.mxu0 0.0
    %905 = vmatpush1.msra.mxu0 0.0
    %906 = vmatprep.subr.mxu0 0.0
    %907 = vmatpush1.msra.mxu0 0.0
    %908 = vmatprep.subr.mxu0 0.0
    %909 = vmatpush1.msra.mxu0 0.0
    %910 = vmatprep.subr.mxu0 0.0
    %911 = vmatpush1.msra.mxu0 0.0
    %912 = vmatprep.subr.mxu0 0.0
    %913 = vmatpush1.msra.mxu0 0.0
    %914 = vmatprep.subr.mxu0 0.0
    %915 = vmatpush1.msra.mxu0 0.0
    %916 = vmatprep.subr.mxu0 0.0
    %917 = vmatpush1.msra.mxu0 0.0
    %918 = vmatprep.subr.mxu0 0.0
    %919 = vmatpush1.msra.mxu0 0.0
    %920 = vmatprep.subr.mxu0 0.0
    %921 = vmatpush1.msra.mxu0 0.0
    %922 = vmatprep.subr.mxu0 0.0
    %923 = vmatpush1.msra.mxu0 0.0
    %924 = vmatprep.subr.mxu0 0.0
    %925 = vmatpush1.msra.mxu0 0.0
    %926 = vmatprep.subr.mxu0 0.0
    %927 = vmatpush1.msra.mxu0 0.0
    %928 = vmatprep.subr.mxu0 0.0
    %929 = vmatpush1.msra.mxu0 0.0
    %930 = vmatprep.subr.mxu0 0.0
    %931 = vmatpush1.msra.mxu0 0.0
    %932 = vmatprep.subr.mxu0 0.0
    %933 = vmatpush1.msra.mxu0 0.0
    %934 = vmatprep.subr.mxu0 0.0
    %935 = vmatpush1.msra.mxu0 0.0
    %936 = vmatprep.subr.mxu0 0.0
    %937 = vmatpush1.msra.mxu0 0.0
    %938 = vmatprep.subr.mxu0 0.0
    %939 = vmatpush1.msra.mxu0 0.0
    %940 = vmatprep.subr.mxu0 0.0
    %941 = vmatpush1.msra.mxu0 0.0
    %942 = vmatprep.subr.mxu0 0.0
    %943 = vmatpush1.msra.mxu0 0.0
    %944 = vmatprep.subr.mxu0 0.0
    %945 = vmatpush1.msra.mxu0 0.0
    %946 = vmatprep.subr.mxu0 0.0
    %947 = vmatpush1.msra.mxu0 0.0
    %948 = vmatprep.subr.mxu0 0.0
    %949 = vmatpush1.msra.mxu0 0.0
    %950 = vmatprep.mubr.f32.mxu0 0.0
    %951 = vmatmul.mubr.f32.gmra.mrb[0].mxu0 %v882
    %v952 = vpop.f32.mrb[0].mxu0
    %v953 = vadd.f32 0.0, %v952
    %v954 = vpop.f32.mrb[0].mxu0
    %955 = vmatprep.mubr.f32.mxu0 0.0
    %956 = vmatmul.mubr.f32.gmra.mrb[0].mxu0 %v884
    %v957 = vpop.f32.mrb[0].mxu0
    %v958 = vadd.f32 0.0, %v957
    %v959 = vpop.f32.mrb[0].mxu0
    %960 = vdwg.mxu0
    %v963 = vrot.slane %v953, 4
    %v964 = vrot.slane %v953, 5
    %v965 = vrot.slane %v953, 6
    %v966 = vrot.slane %v953, 7
    %v967 = vrot.slane %v953, 1
    %v968 = vrot.slane %v953, 2
    %v969 = vrot.slane %v953, 3
    %v970 = vrot.slane %v958, 4
    %v971 = vrot.slane %v958, 5
    %v972 = vrot.slane %v958, 6
    %v973 = vrot.slane %v958, 7
    %v974 = vrot.slane %v958, 1
    %v975 = vrot.slane %v958, 2
    %v976 = vrot.slane %v958, 3
    %v993 = vadd.f32 %v171, %v963
    %v994 = vadd.f32 %v176, %v964
    %v995 = vadd.f32 %v181, %v965
    %v996 = vadd.f32 %v186, %v966
    %v997 = vadd.f32 %v191, %v953
    %v998 = vadd.f32 %v196, %v967
    %v999 = vadd.f32 %v201, %v968
    %v1000 = vadd.f32 %v206, %v969
    %v1001 = vadd.f32 %v211, %v970
    %v1002 = vadd.f32 %v216, %v971
    %v1003 = vadd.f32 %v221, %v972
    %v1004 = vadd.f32 %v226, %v973
    %v1005 = vadd.f32 %v231, %v958
    %v1006 = vadd.f32 %v236, %v974
    %v1007 = vadd.f32 %v241, %v975
    %v1008 = vadd.f32 %v246, %v976
    %v1009 = vtanh.pop %v993
    %v1010 = vtanh.pop %v994
    %v1011 = vtanh.pop %v995
    %v1012 = vtanh.pop %v996
    %v1013 = vtanh.pop %v997
    %v1014 = vtanh.pop %v998
    %v1015 = vtanh.pop %v999
    %v1016 = vtanh.pop %v1000
    %v1017 = vtanh.pop %v1001
    %v1018 = vtanh.pop %v1002
    %v1019 = vtanh.pop %v1003
    %v1020 = vtanh.pop %v1004
    %v1021 = vtanh.pop %v1005
    %v1022 = vtanh.pop %v1006
    %v1023 = vtanh.pop %v1007
    %v1024 = vtanh.pop %v1008
    %v1041 = vrot.slane %v1009, 4
    %v1042 = vrot.slane %v1010, 3
    %v1043 = vsel %vm286, %v1042, %v1041
    %v1044 = vrot.slane %v1011, 2
    %v1045 = vsel %vm289, %v1044, %v1043
    %v1046 = vrot.slane %v1012, 1
    %v1047 = vsel %vm292, %v1046, %v1045
    %v1048 = vsel %vm295, %v1013, %v1047
    %v1049 = vrot.slane %v1014, 7
    %v1050 = vsel %vm298, %v1049, %v1048
    %v1051 = vrot.slane %v1015, 6
    %v1052 = vsel %vm301, %v1051, %v1050
    %v1053 = vrot.slane %v1016, 5
    %v1054 = vsel %vm304, %v1053, %v1052
    %v1055 = vrot.slane %v1017, 4
    %v1056 = vrot.slane %v1018, 3
    %v1057 = vsel %vm286, %v1056, %v1055
    %v1058 = vrot.slane %v1019, 2
    %v1059 = vsel %vm289, %v1058, %v1057
    %v1060 = vrot.slane %v1020, 1
    %v1061 = vsel %vm292, %v1060, %v1059
    %v1062 = vsel %vm295, %v1021, %v1061
    %v1063 = vrot.slane %v1022, 7
    %v1064 = vsel %vm298, %v1063, %v1062
    %v1065 = vrot.slane %v1023, 6
    %v1066 = vsel %vm301, %v1065, %v1064
    %v1067 = vrot.slane %v1024, 5
    %v1068 = vsel %vm304, %v1067, %v1066
    %v1069 = vsel %vm320, %v1054, 0
    %v1071 = vsel %vm320, %v1068, 0
    %1073 = vmatprep.subr.mxu0 0.0
    %1074 = vmatpush1.msra.mxu0 %v249
    %1075 = vmatprep.subr.mxu0 0.0
    %1076 = vmatpush1.msra.mxu0 %v250
    %1077 = vmatprep.subr.mxu0 0.0
    %1078 = vmatpush1.msra.mxu0 %v251
    %1079 = vmatprep.subr.mxu0 0.0
    %1080 = vmatpush1.msra.mxu0 %v252
    %1081 = vmatprep.subr.mxu0 0.0
    %1082 = vmatpush1.msra.mxu0 0.0
    %1083 = vmatprep.subr.mxu0 0.0
    %1084 = vmatpush1.msra.mxu0 0.0
    %1085 = vmatprep.subr.mxu0 0.0
    %1086 = vmatpush1.msra.mxu0 0.0
    %1087 = vmatprep.subr.mxu0 0.0
    %1088 = vmatpush1.msra.mxu0 0.0
    %1089 = vmatprep.subr.mxu0 0.0
    %1090 = vmatpush1.msra.mxu0 0.0
    %1091 = vmatprep.subr.mxu0 0.0
    %1092 = vmatpush1.msra.mxu0 0.0
    %1093 = vmatprep.subr.mxu0 0.0
    %1094 = vmatpush1.msra.mxu0 0.0
    %1095 = vmatprep.subr.mxu0 0.0
    %1096 = vmatpush1.msra.mxu0 0.0
    %1097 = vmatprep.subr.mxu0 0.0
    %1098 = vmatpush1.msra.mxu0 0.0
    %1099 = vmatprep.subr.mxu0 0.0
    %1100 = vmatpush1.msra.mxu0 0.0
    %1101 = vmatprep.subr.mxu0 0.0
    %1102 = vmatpush1.msra.mxu0 0.0
    %1103 = vmatprep.subr.mxu0 0.0
    %1104 = vmatpush1.msra.mxu0 0.0
    %1105 = vmatprep.subr.mxu0 0.0
    %1106 = vmatpush1.msra.mxu0 0.0
    %1107 = vmatprep.subr.mxu0 0.0
    %1108 = vmatpush1.msra.mxu0 0.0
    %1109 = vmatprep.subr.mxu0 0.0
    %1110 = vmatpush1.msra.mxu0 0.0
    %1111 = vmatprep.subr.mxu0 0.0
    %1112 = vmatpush1.msra.mxu0 0.0
    %1113 = vmatprep.subr.mxu0 0.0
    %1114 = vmatpush1.msra.mxu0 0.0
    %1115 = vmatprep.subr.mxu0 0.0
    %1116 = vmatpush1.msra.mxu0 0.0
    %1117 = vmatprep.subr.mxu0 0.0
    %1118 = vmatpush1.msra.mxu0 0.0
    %1119 = vmatprep.subr.mxu0 0.0
    %1120 = vmatpush1.msra.mxu0 0.0
    %1121 = vmatprep.subr.mxu0 0.0
    %1122 = vmatpush1.msra.mxu0 0.0
    %1123 = vmatprep.subr.mxu0 0.0
    %1124 = vmatpush1.msra.mxu0 0.0
    %1125 = vmatprep.subr.mxu0 0.0
    %1126 = vmatpush1.msra.mxu0 0.0
    %1127 = vmatprep.subr.mxu0 0.0
    %1128 = vmatpush1.msra.mxu0 0.0
    %1129 = vmatprep.subr.mxu0 0.0
    %1130 = vmatpush1.msra.mxu0 0.0
    %1131 = vmatprep.subr.mxu0 0.0
    %1132 = vmatpush1.msra.mxu0 0.0
    %1133 = vmatprep.subr.mxu0 0.0
    %1134 = vmatpush1.msra.mxu0 0.0
    %1135 = vmatprep.subr.mxu0 0.0
    %1136 = vmatpush1.msra.mxu0 0.0
    %1137 = vmatprep.mubr.f32.mxu0 0.0
    %1138 = vmatmul.mubr.f32.gmra.mrb[0].mxu0 %v1069
    %v1139 = vpop.f32.mrb[0].mxu0
    %v1140 = vadd.f32 0.0, %v1139
    %v1141 = vpop.f32.mrb[0].mxu0
    %1142 = vmatprep.mubr.f32.mxu0 0.0
    %1143 = vmatmul.mubr.f32.gmra.mrb[0].mxu0 %v1071
    %v1144 = vpop.f32.mrb[0].mxu0
    %v1145 = vadd.f32 0.0, %v1144
    %v1146 = vpop.f32.mrb[0].mxu0
    %1147 = vdwg.mxu0
    %v1150 = vrot.slane %v1140, 3
    %v1151 = vrot.slane %v1140, 4
    %v1152 = vrot.slane %v1140, 5
    %v1153 = vrot.slane %v1140, 6
    %v1154 = vrot.slane %v1140, 7
    %v1155 = vrot.slane %v1140, 1
    %v1156 = vrot.slane %v1140, 2
    %v1157 = vrot.slane %v1145, 3
    %v1158 = vrot.slane %v1145, 4
    %v1159 = vrot.slane %v1145, 5
    %v1160 = vrot.slane %v1145, 6
    %v1161 = vrot.slane %v1145, 7
    %v1162 = vrot.slane %v1145, 1
    %v1163 = vrot.slane %v1145, 2
    %v1180 = vadd.f32 %v171, %v1150
    %v1181 = vadd.f32 %v176, %v1151
    %v1182 = vadd.f32 %v181, %v1152
    %v1183 = vadd.f32 %v186, %v1153
    %v1184 = vadd.f32 %v191, %v1154
    %v1185 = vadd.f32 %v196, %v1140
    %v1186 = vadd.f32 %v201, %v1155
    %v1187 = vadd.f32 %v206, %v1156
    %v1188 = vadd.f32 %v211, %v1157
    %v1189 = vadd.f32 %v216, %v1158
    %v1190 = vadd.f32 %v221, %v1159
    %v1191 = vadd.f32 %v226, %v1160
    %v1192 = vadd.f32 %v231, %v1161
    %v1193 = vadd.f32 %v236, %v1145
    %v1194 = vadd.f32 %v241, %v1162
    %v1195 = vadd.f32 %v246, %v1163
    %v1196 = vtanh.pop %v1180
    %v1197 = vtanh.pop %v1181
    %v1198 = vtanh.pop %v1182
    %v1199 = vtanh.pop %v1183
    %v1200 = vtanh.pop %v1184
    %v1201 = vtanh.pop %v1185
    %v1202 = vtanh.pop %v1186
    %v1203 = vtanh.pop %v1187
    %v1204 = vtanh.pop %v1188
    %v1205 = vtanh.pop %v1189
    %v1206 = vtanh.pop %v1190
    %v1207 = vtanh.pop %v1191
    %v1208 = vtanh.pop %v1192
    %v1209 = vtanh.pop %v1193
    %v1210 = vtanh.pop %v1194
    %v1211 = vtanh.pop %v1195
    %v1228 = vrot.slane %v1196, 5
    %v1229 = vrot.slane %v1197, 4
    %v1230 = vsel %vm286, %v1229, %v1228
    %v1231 = vrot.slane %v1198, 3
    %v1232 = vsel %vm289, %v1231, %v1230
    %v1233 = vrot.slane %v1199, 2
    %v1234 = vsel %vm292, %v1233, %v1232
    %v1235 = vrot.slane %v1200, 1
    %v1236 = vsel %vm295, %v1235, %v1234
    %v1237 = vsel %vm298, %v1201, %v1236
    %v1238 = vrot.slane %v1202, 7
    %v1239 = vsel %vm301, %v1238, %v1237
    %v1240 = vrot.slane %v1203, 6
    %v1241 = vsel %vm304, %v1240, %v1239
    %v1242 = vrot.slane %v1204, 5
    %v1243 = vrot.slane %v1205, 4
    %v1244 = vsel %vm286, %v1243, %v1242
    %v1245 = vrot.slane %v1206, 3
    %v1246 = vsel %vm289, %v1245, %v1244
    %v1247 = vrot.slane %v1207, 2
    %v1248 = vsel %vm292, %v1247, %v1246
    %v1249 = vrot.slane %v1208, 1
    %v1250 = vsel %vm295, %v1249, %v1248
    %v1251 = vsel %vm298, %v1209, %v1250
    %v1252 = vrot.slane %v1210, 7
    %v1253 = vsel %vm301, %v1252, %v1251
    %v1254 = vrot.slane %v1211, 6
    %v1255 = vsel %vm304, %v1254, %v1253
    %v1256 = vsel %vm320, %v1241, 0
    %v1258 = vsel %vm320, %v1255, 0
    %1260 = vmatprep.subr.mxu0 0.0
    %1261 = vmatpush1.msra.mxu0 %v249
    %1262 = vmatprep.subr.mxu0 0.0
    %1263 = vmatpush1.msra.mxu0 %v250
    %1264 = vmatprep.subr.mxu0 0.0
    %1265 = vmatpush1.msra.mxu0 %v251
    %1266 = vmatprep.subr.mxu0 0.0
    %1267 = vmatpush1.msra.mxu0 %v252
    %1268 = vmatprep.subr.mxu0 0.0
    %1269 = vmatpush1.msra.mxu0 0.0
    %1270 = vmatprep.subr.mxu0 0.0
    %1271 = vmatpush1.msra.mxu0 0.0
    %1272 = vmatprep.subr.mxu0 0.0
    %1273 = vmatpush1.msra.mxu0 0.0
    %1274 = vmatprep.subr.mxu0 0.0
    %1275 = vmatpush1.msra.mxu0 0.0
    %1276 = vmatprep.subr.mxu0 0.0
    %1277 = vmatpush1.msra.mxu0 0.0
    %1278 = vmatprep.subr.mxu0 0.0
    %1279 = vmatpush1.msra.mxu0 0.0
    %1280 = vmatprep.subr.mxu0 0.0
    %1281 = vmatpush1.msra.mxu0 0.0
    %1282 = vmatprep.subr.mxu0 0.0
    %1283 = vmatpush1.msra.mxu0 0.0
    %1284 = vmatprep.subr.mxu0 0.0
    %1285 = vmatpush1.msra.mxu0 0.0
    %1286 = vmatprep.subr.mxu0 0.0
    %1287 = vmatpush1.msra.mxu0 0.0
    %1288 = vmatprep.subr.mxu0 0.0
    %1289 = vmatpush1.msra.mxu0 0.0
    %1290 = vmatprep.subr.mxu0 0.0
    %1291 = vmatpush1.msra.mxu0 0.0
    %1292 = vmatprep.subr.mxu0 0.0
    %1293 = vmatpush1.msra.mxu0 0.0
    %1294 = vmatprep.subr.mxu0 0.0
    %1295 = vmatpush1.msra.mxu0 0.0
    %1296 = vmatprep.subr.mxu0 0.0
    %1297 = vmatpush1.msra.mxu0 0.0
    %1298 = vmatprep.subr.mxu0 0.0
    %1299 = vmatpush1.msra.mxu0 0.0
    %1300 = vmatprep.subr.mxu0 0.0
    %1301 = vmatpush1.msra.mxu0 0.0
    %1302 = vmatprep.subr.mxu0 0.0
    %1303 = vmatpush1.msra.mxu0 0.0
    %1304 = vmatprep.subr.mxu0 0.0
    %1305 = vmatpush1.msra.mxu0 0.0
    %1306 = vmatprep.subr.mxu0 0.0
    %1307 = vmatpush1.msra.mxu0 0.0
    %1308 = vmatprep.subr.mxu0 0.0
    %1309 = vmatpush1.msra.mxu0 0.0
    %1310 = vmatprep.subr.mxu0 0.0
    %1311 = vmatpush1.msra.mxu0 0.0
    %1312 = vmatprep.subr.mxu0 0.0
    %1313 = vmatpush1.msra.mxu0 0.0
    %1314 = vmatprep.subr.mxu0 0.0
    %1315 = vmatpush1.msra.mxu0 0.0
    %1316 = vmatprep.subr.mxu0 0.0
    %1317 = vmatpush1.msra.mxu0 0.0
    %1318 = vmatprep.subr.mxu0 0.0
    %1319 = vmatpush1.msra.mxu0 0.0
    %1320 = vmatprep.subr.mxu0 0.0
    %1321 = vmatpush1.msra.mxu0 0.0
    %1322 = vmatprep.subr.mxu0 0.0
    %1323 = vmatpush1.msra.mxu0 0.0
    %1324 = vmatprep.mubr.f32.mxu0 0.0
    %1325 = vmatmul.mubr.f32.gmra.mrb[0].mxu0 %v1256
    %v1326 = vpop.f32.mrb[0].mxu0
    %v1327 = vadd.f32 0.0, %v1326
    %v1328 = vpop.f32.mrb[0].mxu0
    %1329 = vmatprep.mubr.f32.mxu0 0.0
    %1330 = vmatmul.mubr.f32.gmra.mrb[0].mxu0 %v1258
    %v1331 = vpop.f32.mrb[0].mxu0
    %v1332 = vadd.f32 0.0, %v1331
    %v1333 = vpop.f32.mrb[0].mxu0
    %1334 = vdwg.mxu0
    %v1337 = vrot.slane %v1327, 2
    %v1338 = vrot.slane %v1327, 3
    %v1339 = vrot.slane %v1327, 4
    %v1340 = vrot.slane %v1327, 5
    %v1341 = vrot.slane %v1327, 6
    %v1342 = vrot.slane %v1327, 7
    %v1343 = vrot.slane %v1327, 1
    %v1344 = vrot.slane %v1332, 2
    %v1345 = vrot.slane %v1332, 3
    %v1346 = vrot.slane %v1332, 4
    %v1347 = vrot.slane %v1332, 5
    %v1348 = vrot.slane %v1332, 6
    %v1349 = vrot.slane %v1332, 7
    %v1350 = vrot.slane %v1332, 1
    %v1367 = vadd.f32 %v171, %v1337
    %v1368 = vadd.f32 %v176, %v1338
    %v1369 = vadd.f32 %v181, %v1339
    %v1370 = vadd.f32 %v186, %v1340
    %v1371 = vadd.f32 %v191, %v1341
    %v1372 = vadd.f32 %v196, %v1342
    %v1373 = vadd.f32 %v201, %v1327
    %v1374 = vadd.f32 %v206, %v1343
    %v1375 = vadd.f32 %v211, %v1344
    %v1376 = vadd.f32 %v216, %v1345
    %v1377 = vadd.f32 %v221, %v1346
    %v1378 = vadd.f32 %v226, %v1347
    %v1379 = vadd.f32 %v231, %v1348
    %v1380 = vadd.f32 %v236, %v1349
    %v1381 = vadd.f32 %v241, %v1332
    %v1382 = vadd.f32 %v246, %v1350
    %v1383 = vtanh.pop %v1367
    %v1384 = vtanh.pop %v1368
    %v1385 = vtanh.pop %v1369
    %v1386 = vtanh.pop %v1370
    %v1387 = vtanh.pop %v1371
    %v1388 = vtanh.pop %v1372
    %v1389 = vtanh.pop %v1373
    %v1390 = vtanh.pop %v1374
    %v1391 = vtanh.pop %v1375
    %v1392 = vtanh.pop %v1376
    %v1393 = vtanh.pop %v1377
    %v1394 = vtanh.pop %v1378
    %v1395 = vtanh.pop %v1379
    %v1396 = vtanh.pop %v1380
    %v1397 = vtanh.pop %v1381
    %v1398 = vtanh.pop %v1382
    %v1415 = vrot.slane %v1383, 6
    %v1416 = vrot.slane %v1384, 5
    %v1417 = vsel %vm286, %v1416, %v1415
    %v1418 = vrot.slane %v1385, 4
    %v1419 = vsel %vm289, %v1418, %v1417
    %v1420 = vrot.slane %v1386, 3
    %v1421 = vsel %vm292, %v1420, %v1419
    %v1422 = vrot.slane %v1387, 2
    %v1423 = vsel %vm295, %v1422, %v1421
    %v1424 = vrot.slane %v1388, 1
    %v1425 = vsel %vm298, %v1424, %v1423
    %v1426 = vsel %vm301, %v1389, %v1425
    %v1427 = vrot.slane %v1390, 7
    %v1428 = vsel %vm304, %v1427, %v1426
    %v1429 = vrot.slane %v1391, 6
    %v1430 = vrot.slane %v1392, 5
    %v1431 = vsel %vm286, %v1430, %v1429
    %v1432 = vrot.slane %v1393, 4
    %v1433 = vsel %vm289, %v1432, %v1431
    %v1434 = vrot.slane %v1394, 3
    %v1435 = vsel %vm292, %v1434, %v1433
    %v1436 = vrot.slane %v1395, 2
    %v1437 = vsel %vm295, %v1436, %v1435
    %v1438 = vrot.slane %v1396, 1
    %v1439 = vsel %vm298, %v1438, %v1437
    %v1440 = vsel %vm301, %v1397, %v1439
    %v1441 = vrot.slane %v1398, 7
    %v1442 = vsel %vm304, %v1441, %v1440
    %v1443 = vsel %vm320, %v1428, 0
    %v1445 = vsel %vm320, %v1442, 0
    %1447 = vmatprep.subr.mxu0 0.0
    %1448 = vmatpush1.msra.mxu0 %v249
    %1449 = vmatprep.subr.mxu0 0.0
    %1450 = vmatpush1.msra.mxu0 %v250
    %1451 = vmatprep.subr.mxu0 0.0
    %1452 = vmatpush1.msra.mxu0 %v251
    %1453 = vmatprep.subr.mxu0 0.0
    %1454 = vmatpush1.msra.mxu0 %v252
    %1455 = vmatprep.subr.mxu0 0.0
    %1456 = vmatpush1.msra.mxu0 0.0
    %1457 = vmatprep.subr.mxu0 0.0
    %1458 = vmatpush1.msra.mxu0 0.0
    %1459 = vmatprep.subr.mxu0 0.0
    %1460 = vmatpush1.msra.mxu0 0.0
    %1461 = vmatprep.subr.mxu0 0.0
    %1462 = vmatpush1.msra.mxu0 0.0
    %1463 = vmatprep.subr.mxu0 0.0
    %1464 = vmatpush1.msra.mxu0 0.0
    %1465 = vmatprep.subr.mxu0 0.0
    %1466 = vmatpush1.msra.mxu0 0.0
    %1467 = vmatprep.subr.mxu0 0.0
    %1468 = vmatpush1.msra.mxu0 0.0
    %1469 = vmatprep.subr.mxu0 0.0
    %1470 = vmatpush1.msra.mxu0 0.0
    %1471 = vmatprep.subr.mxu0 0.0
    %1472 = vmatpush1.msra.mxu0 0.0
    %1473 = vmatprep.subr.mxu0 0.0
    %1474 = vmatpush1.msra.mxu0 0.0
    %1475 = vmatprep.subr.mxu0 0.0
    %1476 = vmatpush1.msra.mxu0 0.0
    %1477 = vmatprep.subr.mxu0 0.0
    %1478 = vmatpush1.msra.mxu0 0.0
    %1479 = vmatprep.subr.mxu0 0.0
    %1480 = vmatpush1.msra.mxu0 0.0
    %1481 = vmatprep.subr.mxu0 0.0
    %1482 = vmatpush1.msra.mxu0 0.0
    %1483 = vmatprep.subr.mxu0 0.0
    %1484 = vmatpush1.msra.mxu0 0.0
    %1485 = vmatprep.subr.mxu0 0.0
    %1486 = vmatpush1.msra.mxu0 0.0
    %1487 = vmatprep.subr.mxu0 0.0
    %1488 = vmatpush1.msra.mxu0 0.0
    %1489 = vmatprep.subr.mxu0 0.0
    %1490 = vmatpush1.msra.mxu0 0.0
    %1491 = vmatprep.subr.mxu0 0.0
    %1492 = vmatpush1.msra.mxu0 0.0
    %1493 = vmatprep.subr.mxu0 0.0
    %1494 = vmatpush1.msra.mxu0 0.0
    %1495 = vmatprep.subr.mxu0 0.0
    %1496 = vmatpush1.msra.mxu0 0.0
    %1497 = vmatprep.subr.mxu0 0.0
    %1498 = vmatpush1.msra.mxu0 0.0
    %1499 = vmatprep.subr.mxu0 0.0
    %1500 = vmatpush1.msra.mxu0 0.0
    %1501 = vmatprep.subr.mxu0 0.0
    %1502 = vmatpush1.msra.mxu0 0.0
    %1503 = vmatprep.subr.mxu0 0.0
    %1504 = vmatpush1.msra.mxu0 0.0
    %1505 = vmatprep.subr.mxu0 0.0
    %1506 = vmatpush1.msra.mxu0 0.0
    %1507 = vmatprep.subr.mxu0 0.0
    %1508 = vmatpush1.msra.mxu0 0.0
    %1509 = vmatprep.subr.mxu0 0.0
    %1510 = vmatpush1.msra.mxu0 0.0
    %1511 = vmatprep.mubr.f32.mxu0 0.0
    %1512 = vmatmul.mubr.f32.gmra.mrb[0].mxu0 %v1443
    %v1513 = vpop.f32.mrb[0].mxu0
    %v1514 = vadd.f32 0.0, %v1513
    %v1515 = vpop.f32.mrb[0].mxu0
    %1516 = vmatprep.mubr.f32.mxu0 0.0
    %1517 = vmatmul.mubr.f32.gmra.mrb[0].mxu0 %v1445
    %v1518 = vpop.f32.mrb[0].mxu0
    %v1519 = vadd.f32 0.0, %v1518
    %v1520 = vpop.f32.mrb[0].mxu0
    %1521 = vdwg.mxu0
    %v1524 = vrot.slane %v1514, 1
    %v1525 = vrot.slane %v1514, 2
    %v1526 = vrot.slane %v1514, 3
    %v1527 = vrot.slane %v1514, 4
    %v1528 = vrot.slane %v1514, 5
    %v1529 = vrot.slane %v1514, 6
    %v1530 = vrot.slane %v1514, 7
    %v1531 = vrot.slane %v1519, 1
    %v1532 = vrot.slane %v1519, 2
    %v1533 = vrot.slane %v1519, 3
    %v1534 = vrot.slane %v1519, 4
    %v1535 = vrot.slane %v1519, 5
    %v1536 = vrot.slane %v1519, 6
    %v1537 = vrot.slane %v1519, 7
    %v1554 = vadd.f32 %v171, %v1524
    %v1555 = vadd.f32 %v176, %v1525
    %v1556 = vadd.f32 %v181, %v1526
    %v1557 = vadd.f32 %v186, %v1527
    %v1558 = vadd.f32 %v191, %v1528
    %v1559 = vadd.f32 %v196, %v1529
    %v1560 = vadd.f32 %v201, %v1530
    %v1561 = vadd.f32 %v206, %v1514
    %v1562 = vadd.f32 %v211, %v1531
    %v1563 = vadd.f32 %v216, %v1532
    %v1564 = vadd.f32 %v221, %v1533
    %v1565 = vadd.f32 %v226, %v1534
    %v1566 = vadd.f32 %v231, %v1535
    %v1567 = vadd.f32 %v236, %v1536
    %v1568 = vadd.f32 %v241, %v1537
    %v1569 = vadd.f32 %v246, %v1519
    %v1570 = vtanh.pop %v1554
    %v1571 = vtanh.pop %v1555
    %v1572 = vtanh.pop %v1556
    %v1573 = vtanh.pop %v1557
    %v1574 = vtanh.pop %v1558
    %v1575 = vtanh.pop %v1559
    %v1576 = vtanh.pop %v1560
    %v1577 = vtanh.pop %v1561
    %v1578 = vtanh.pop %v1562
    %v1579 = vtanh.pop %v1563
    %v1580 = vtanh.pop %v1564
    %v1581 = vtanh.pop %v1565
    %v1582 = vtanh.pop %v1566
    %v1583 = vtanh.pop %v1567
    %v1584 = vtanh.pop %v1568
    %v1585 = vtanh.pop %v1569
    %v1602 = vrot.slane %v1571, 7
    %v1603 = vrot.slane %v1572, 6
    %v1604 = vsel %vm286, %v1603, %v1602
    %v1605 = vrot.slane %v1573, 5
    %v1606 = vsel %vm289, %v1605, %v1604
    %v1607 = vrot.slane %v1574, 4
    %v1608 = vsel %vm292, %v1607, %v1606
    %v1609 = vrot.slane %v1575, 3
    %v1610 = vsel %vm295, %v1609, %v1608
    %v1611 = vrot.slane %v1576, 2
    %v1612 = vsel %vm298, %v1611, %v1610
    %v1613 = vrot.slane %v1577, 1
    %v1614 = vsel %vm301, %v1613, %v1612
    %v1615 = vsel %vm304, %v1578, %v1614
    %v1616 = vrot.slane %v1579, 7
    %v1617 = vrot.slane %v1580, 6
    %v1618 = vsel %vm286, %v1617, %v1616
    %v1619 = vrot.slane %v1581, 5
    %v1620 = vsel %vm289, %v1619, %v1618
    %v1621 = vrot.slane %v1582, 4
    %v1622 = vsel %vm292, %v1621, %v1620
    %v1623 = vrot.slane %v1583, 3
    %v1624 = vsel %vm295, %v1623, %v1622
    %v1625 = vrot.slane %v1584, 2
    %v1626 = vsel %vm298, %v1625, %v1624
    %v1627 = vrot.slane %v1585, 1
    %v1628 = vsel %vm301, %v1627, %v1626
    %vm1632 = vcmask 261127
    %1633 = vst.msk [vmem:[#allocation2 - $0x7] sm:$0x80] %vm1632, %v1570
    %1634 = vst.msk [vmem:[#allocation2 + $0x1] sm:$0xff] %vm320, %v1615
    %vm1635 = vcmask 260096
    %1636 = vst.msk [vmem:[#allocation2 + $0x9] sm:$0x7f] %vm1635, %v1628
    %vm1637 = vcmask 1040384
    %v1638 = vsel %vm1637, %v253, %v448
    %v1639 = vsel %vm1637, %v254, %v449
    %v1640 = vsel %vm1637, %v255, %v450
    %v1641 = vsel %vm1637, %v256, %v451
    %v1642 = vsel %vm1637, %v257, %v452
    %v1643 = vsel %vm1637, %v258, %v453
    %v1644 = vsel %vm1637, %v259, %v454
    %v1645 = vsel %vm1637, %v260, %v455
    %v1646 = vsel %vm1637, %v261, %v456
    %v1647 = vsel %vm1637, %v262, %v457
    %v1648 = vsel %vm1637, %v263, %v458
    %v1649 = vsel %vm1637, %v264, %v459
    %v1650 = vsel %vm1637, %v265, %v460
    %v1651 = vsel %vm1637, %v266, %v461
    %v1652 = vsel %vm1637, %v267, %v462
    %v1653 = vsel %vm1637, %v268, %v463
    %v1654 = vsel %vm100, %v1638, %v635
    %v1655 = vsel %vm100, %v1639, %v636
    %v1656 = vsel %vm100, %v1640, %v637
    %v1657 = vsel %vm100, %v1641, %v638
    %v1658 = vsel %vm100, %v1642, %v639
    %v1659 = vsel %vm100, %v1643, %v640
    %v1660 = vsel %vm100, %v1644, %v641
    %v1661 = vsel %vm100, %v1645, %v642
    %v1662 = vsel %vm100, %v1646, %v643
    %v1663 = vsel %vm100, %v1647, %v644
    %v1664 = vsel %vm100, %v1648, %v645
    %v1665 = vsel %vm100, %v1649, %v646
    %v1666 = vsel %vm100, %v1650, %v647
    %v1667 = vsel %vm100, %v1651, %v648
    %v1668 = vsel %vm100, %v1652, %v649
    %v1669 = vsel %vm100, %v1653, %v650
    %vm1670 = vcmask 1042432
    %v1671 = vsel %vm1670, %v1654, %v822
    %v1672 = vsel %vm1670, %v1655, %v823
    %v1673 = vsel %vm1670, %v1656, %v824
    %v1674 = vsel %vm1670, %v1657, %v825
    %v1675 = vsel %vm1670, %v1658, %v826
    %v1676 = vsel %vm1670, %v1659, %v827
    %v1677 = vsel %vm1670, %v1660, %v828
    %v1678 = vsel %vm1670, %v1661, %v829
    %v1679 = vsel %vm1670, %v1662, %v830
    %v1680 = vsel %vm1670, %v1663, %v831
    %v1681 = vsel %vm1670, %v1664, %v832
    %v1682 = vsel %vm1670, %v1665, %v833
    %v1683 = vsel %vm1670, %v1666, %v834
    %v1684 = vsel %vm1670, %v1667, %v835
    %v1685 = vsel %vm1670, %v1668, %v836
    %v1686 = vsel %vm1670, %v1669, %v837
    %vm1687 = vcmask 1043456
    %v1688 = vsel %vm1687, %v1671, %v1009
    %v1689 = vsel %vm1687, %v1672, %v1010
    %v1690 = vsel %vm1687, %v1673, %v1011
    %v1691 = vsel %vm1687, %v1674, %v1012
    %v1692 = vsel %vm1687, %v1675, %v1013
    %v1693 = vsel %vm1687, %v1676, %v1014
    %v1694 = vsel %vm1687, %v1677, %v1015
    %v1695 = vsel %vm1687, %v1678, %v1016
    %v1696 = vsel %vm1687, %v1679, %v1017
    %v1697 = vsel %vm1687, %v1680, %v1018
    %v1698 = vsel %vm1687, %v1681, %v1019
    %v1699 = vsel %vm1687, %v1682, %v1020
    %v1700 = vsel %vm1687, %v1683, %v1021
    %v1701 = vsel %vm1687, %v1684, %v1022
    %v1702 = vsel %vm1687, %v1685, %v1023
    %v1703 = vsel %vm1687, %v1686, %v1024
    %vm1704 = vcmask 1044480
    %v1705 = vsel %vm1704, %v1688, %v1196
    %v1706 = vsel %vm1704, %v1689, %v1197
    %v1707 = vsel %vm1704, %v1690, %v1198
    %v1708 = vsel %vm1704, %v1691, %v1199
    %v1709 = vsel %vm1704, %v1692, %v1200
    %v1710 = vsel %vm1704, %v1693, %v1201
    %v1711 = vsel %vm1704, %v1694, %v1202
    %v1712 = vsel %vm1704, %v1695, %v1203
    %v1713 = vsel %vm1704, %v1696, %v1204
    %v1714 = vsel %vm1704, %v1697, %v1205
    %v1715 = vsel %vm1704, %v1698, %v1206
    %v1716 = vsel %vm1704, %v1699, %v1207
    %v1717 = vsel %vm1704, %v1700, %v1208
    %v1718 = vsel %vm1704, %v1701, %v1209
    %v1719 = vsel %vm1704, %v1702, %v1210
    %v1720 = vsel %vm1704, %v1703, %v1211
    %vm1721 = vcmask 1045504
    %v1722 = vsel %vm1721, %v1705, %v1383
    %v1723 = vsel %vm1721, %v1706, %v1384
    %v1724 = vsel %vm1721, %v1707, %v1385
    %v1725 = vsel %vm1721, %v1708, %v1386
    %v1726 = vsel %vm1721, %v1709, %v1387
    %v1727 = vsel %vm1721, %v1710, %v1388
    %v1728 = vsel %vm1721, %v1711, %v1389
    %v1729 = vsel %vm1721, %v1712, %v1390
    %v1730 = vsel %vm1721, %v1713, %v1391
    %v1731 = vsel %vm1721, %v1714, %v1392
    %v1732 = vsel %vm1721, %v1715, %v1393
    %v1733 = vsel %vm1721, %v1716, %v1394
    %v1734 = vsel %vm1721, %v1717, %v1395
    %v1735 = vsel %vm1721, %v1718, %v1396
    %v1736 = vsel %vm1721, %v1719, %v1397
    %v1737 = vsel %vm1721, %v1720, %v1398
    %vm1738 = vcmask 1046528
    %v1739 = vsel %vm1738, %v1722, %v1570
    %v1740 = vsel %vm1738, %v1723, %v1571
    %v1741 = vsel %vm1738, %v1724, %v1572
    %v1742 = vsel %vm1738, %v1725, %v1573
    %v1743 = vsel %vm1738, %v1726, %v1574
    %v1744 = vsel %vm1738, %v1727, %v1575
    %v1745 = vsel %vm1738, %v1728, %v1576
    %v1746 = vsel %vm1738, %v1729, %v1577
    %v1747 = vsel %vm1738, %v1730, %v1578
    %v1748 = vsel %vm1738, %v1731, %v1579
    %v1749 = vsel %vm1738, %v1732, %v1580
    %v1750 = vsel %vm1738, %v1733, %v1581
    %v1751 = vsel %vm1738, %v1734, %v1582
    %v1752 = vsel %vm1738, %v1735, %v1583
    %v1753 = vsel %vm1738, %v1736, %v1584
    %v1754 = vsel %vm1738, %v1737, %v1585
    %v1755 = vld [vmem:[%s4] sm:$0xff]
    %v1756 = vld [vmem:[%s4 + $0x8] sm:$0xff]
    %v1757 = vld [vmem:[%s4 + $0x10] sm:$0xff]
    %v1758 = vld [vmem:[%s4 + $0x18] sm:$0xff]
    %v1759 = vld [vmem:[%s5] sm:$0x1]
    %v1761 = vlaneseq
    %v1762 = vshrl.u32 %v1761, 7
    %v1763 = vsub.s32 0, %v1762
    %v1764 = vrot.slane %v1759, %v1763
    %v1767 = vsel %vm320, %v1739, 0
    %v1770 = vsel %vm320, %v1740, 0
    %v1773 = vsel %vm320, %v1741, 0
    %v1776 = vsel %vm320, %v1742, 0
    %v1779 = vsel %vm320, %v1743, 0
    %v1782 = vsel %vm320, %v1744, 0
    %v1785 = vsel %vm320, %v1745, 0
    %v1788 = vsel %vm320, %v1746, 0
    %v1791 = vsel %vm320, %v1747, 0
    %v1794 = vsel %vm320, %v1748, 0
    %v1797 = vsel %vm320, %v1749, 0
    %v1800 = vsel %vm320, %v1750, 0
    %v1803 = vsel %vm320, %v1751, 0
    %v1806 = vsel %vm320, %v1752, 0
    %v1809 = vsel %vm320, %v1753, 0
    %v1812 = vsel %vm320, %v1754, 0
    %1814 = vmatprep.subr.mxu0 0.0
    %1815 = vmatpush1.msra.mxu0 %v1755
    %1816 = vmatprep.subr.mxu0 0.0
    %1817 = vmatpush1.msra.mxu0 %v1756
    %1818 = vmatprep.subr.mxu0 0.0
    %1819 = vmatpush1.msra.mxu0 %v1757
    %1820 = vmatprep.subr.mxu0 0.0
    %1821 = vmatpush1.msra.mxu0 %v1758
    %1822 = vmatprep.subr.mxu0 0.0
    %1823 = vmatpush1.msra.mxu0 0.0
    %1824 = vmatprep.subr.mxu0 0.0
    %1825 = vmatpush1.msra.mxu0 0.0
    %1826 = vmatprep.subr.mxu0 0.0
    %1827 = vmatpush1.msra.mxu0 0.0
    %1828 = vmatprep.subr.mxu0 0.0
    %1829 = vmatpush1.msra.mxu0 0.0
    %1830 = vmatprep.subr.mxu0 0.0
    %1831 = vmatpush1.msra.mxu0 0.0
    %1832 = vmatprep.subr.mxu0 0.0
    %1833 = vmatpush1.msra.mxu0 0.0
    %1834 = vmatprep.subr.mxu0 0.0
    %1835 = vmatpush1.msra.mxu0 0.0
    %1836 = vmatprep.subr.mxu0 0.0
    %1837 = vmatpush1.msra.mxu0 0.0
    %1838 = vmatprep.subr.mxu0 0.0
    %1839 = vmatpush1.msra.mxu0 0.0
    %1840 = vmatprep.subr.mxu0 0.0
    %1841 = vmatpush1.msra.mxu0 0.0
    %1842 = vmatprep.subr.mxu0 0.0
    %1843 = vmatpush1.msra.mxu0 0.0
    %1844 = vmatprep.subr.mxu0 0.0
    %1845 = vmatpush1.msra.mxu0 0.0
    %1846 = vmatprep.subr.mxu0 0.0
    %1847 = vmatpush1.msra.mxu0 0.0
    %1848 = vmatprep.subr.mxu0 0.0
    %1849 = vmatpush1.msra.mxu0 0.0
    %1850 = vmatprep.subr.mxu0 0.0
    %1851 = vmatpush1.msra.mxu0 0.0
    %1852 = vmatprep.subr.mxu0 0.0
    %1853 = vmatpush1.msra.mxu0 0.0
    %1854 = vmatprep.subr.mxu0 0.0
    %1855 = vmatpush1.msra.mxu0 0.0
    %1856 = vmatprep.subr.mxu0 0.0
    %1857 = vmatpush1.msra.mxu0 0.0
    %1858 = vmatprep.subr.mxu0 0.0
    %1859 = vmatpush1.msra.mxu0 0.0
    %1860 = vmatprep.subr.mxu0 0.0
    %1861 = vmatpush1.msra.mxu0 0.0
    %1862 = vmatprep.subr.mxu0 0.0
    %1863 = vmatpush1.msra.mxu0 0.0
    %1864 = vmatprep.subr.mxu0 0.0
    %1865 = vmatpush1.msra.mxu0 0.0
    %1866 = vmatprep.subr.mxu0 0.0
    %1867 = vmatpush1.msra.mxu0 0.0
    %1868 = vmatprep.subr.mxu0 0.0
    %1869 = vmatpush1.msra.mxu0 0.0
    %1870 = vmatprep.subr.mxu0 0.0
    %1871 = vmatpush1.msra.mxu0 0.0
    %1872 = vmatprep.subr.mxu0 0.0
    %1873 = vmatpush1.msra.mxu0 0.0
    %1874 = vmatprep.subr.mxu0 0.0
    %1875 = vmatpush1.msra.mxu0 0.0
    %1876 = vmatprep.subr.mxu0 0.0
    %1877 = vmatpush1.msra.mxu0 0.0
    %1878 = vmatprep.mubr.f32.mxu0 0.0
    %1879 = vmatmul.mubr.f32.gmra.mrb[0].mxu0 %v1767
    %v1880 = vpop.f32.mrb[0].mxu0
    %v1881 = vadd.f32 %v1764, %v1880
    %v1882 = vpop.f32.mrb[0].mxu0
    %1883 = vmatprep.mubr.f32.mxu0 0.0
    %1884 = vmatmul.mubr.f32.gmra.mrb[0].mxu0 %v1770
    %v1885 = vpop.f32.mrb[0].mxu0
    %v1886 = vadd.f32 %v1764, %v1885
    %v1887 = vpop.f32.mrb[0].mxu0
    %1888 = vmatprep.mubr.f32.mxu0 0.0
    %1889 = vmatmul.mubr.f32.gmra.mrb[0].mxu0 %v1773
    %v1890 = vpop.f32.mrb[0].mxu0
    %v1891 = vadd.f32 %v1764, %v1890
    %v1892 = vpop.f32.mrb[0].mxu0
    %1893 = vmatprep.mubr.f32.mxu0 0.0
    %1894 = vmatmul.mubr.f32.gmra.mrb[0].mxu0 %v1776
    %v1895 = vpop.f32.mrb[0].mxu0
    %v1896 = vadd.f32 %v1764, %v1895
    %v1897 = vpop.f32.mrb[0].mxu0
    %1898 = vmatprep.mubr.f32.mxu0 0.0
    %1899 = vmatmul.mubr.f32.gmra.mrb[0].mxu0 %v1779
    %v1900 = vpop.f32.mrb[0].mxu0
    %v1901 = vadd.f32 %v1764, %v1900
    %v1902 = vpop.f32.mrb[0].mxu0
    %1903 = vmatprep.mubr.f32.mxu0 0.0
    %1904 = vmatmul.mubr.f32.gmra.mrb[0].mxu0 %v1782
    %v1905 = vpop.f32.mrb[0].mxu0
    %v1906 = vadd.f32 %v1764, %v1905
    %v1907 = vpop.f32.mrb[0].mxu0
    %1908 = vmatprep.mubr.f32.mxu0 0.0
    %1909 = vmatmul.mubr.f32.gmra.mrb[0].mxu0 %v1785
    %v1910 = vpop.f32.mrb[0].mxu0
    %v1911 = vadd.f32 %v1764, %v1910
    %v1912 = vpop.f32.mrb[0].mxu0
    %1913 = vmatprep.mubr.f32.mxu0 0.0
    %1914 = vmatmul.mubr.f32.gmra.mrb[0].mxu0 %v1788
    %v1915 = vpop.f32.mrb[0].mxu0
    %v1916 = vadd.f32 %v1764, %v1915
    %v1917 = vpop.f32.mrb[0].mxu0
    %1918 = vmatprep.mubr.f32.mxu0 0.0
    %1919 = vmatmul.mubr.f32.gmra.mrb[0].mxu0 %v1791
    %v1920 = vpop.f32.mrb[0].mxu0
    %v1921 = vadd.f32 %v1764, %v1920
    %v1922 = vpop.f32.mrb[0].mxu0
    %1923 = vmatprep.mubr.f32.mxu0 0.0
    %1924 = vmatmul.mubr.f32.gmra.mrb[0].mxu0 %v1794
    %v1925 = vpop.f32.mrb[0].mxu0
    %v1926 = vadd.f32 %v1764, %v1925
    %v1927 = vpop.f32.mrb[0].mxu0
    %1928 = vmatprep.mubr.f32.mxu0 0.0
    %1929 = vmatmul.mubr.f32.gmra.mrb[0].mxu0 %v1797
    %v1930 = vpop.f32.mrb[0].mxu0
    %v1931 = vadd.f32 %v1764, %v1930
    %v1932 = vpop.f32.mrb[0].mxu0
    %1933 = vmatprep.mubr.f32.mxu0 0.0
    %1934 = vmatmul.mubr.f32.gmra.mrb[0].mxu0 %v1800
    %v1935 = vpop.f32.mrb[0].mxu0
    %v1936 = vadd.f32 %v1764, %v1935
    %v1937 = vpop.f32.mrb[0].mxu0
    %1938 = vmatprep.mubr.f32.mxu0 0.0
    %1939 = vmatmul.mubr.f32.gmra.mrb[0].mxu0 %v1803
    %v1940 = vpop.f32.mrb[0].mxu0
    %v1941 = vadd.f32 %v1764, %v1940
    %v1942 = vpop.f32.mrb[0].mxu0
    %1943 = vmatprep.mubr.f32.mxu0 0.0
    %1944 = vmatmul.mubr.f32.gmra.mrb[0].mxu0 %v1806
    %v1945 = vpop.f32.mrb[0].mxu0
    %v1946 = vadd.f32 %v1764, %v1945
    %v1947 = vpop.f32.mrb[0].mxu0
    %1948 = vmatprep.mubr.f32.mxu0 0.0
    %1949 = vmatmul.mubr.f32.gmra.mrb[0].mxu0 %v1809
    %v1950 = vpop.f32.mrb[0].mxu0
    %v1951 = vadd.f32 %v1764, %v1950
    %v1952 = vpop.f32.mrb[0].mxu0
    %1953 = vmatprep.mubr.f32.mxu0 0.0
    %1954 = vmatmul.mubr.f32.gmra.mrb[0].mxu0 %v1812
    %v1955 = vpop.f32.mrb[0].mxu0
    %v1956 = vadd.f32 %v1764, %v1955
    %v1957 = vpop.f32.mrb[0].mxu0
    %1958 = vdwg.mxu0
    %vm1959 = vcmask 15360
    %1960 = vst.msk [vmem:[%s6] sm:$0xff] %vm1959, %v1881
    %1961 = vst.msk [vmem:[%s6 + $0x8] sm:$0xff] %vm1959, %v1886
    %1962 = vst.msk [vmem:[%s6 + $0x10] sm:$0xff] %vm1959, %v1891
    %1963 = vst.msk [vmem:[%s6 + $0x18] sm:$0xff] %vm1959, %v1896
    %1964 = vst.msk [vmem:[%s6 + $0x20] sm:$0xff] %vm1959, %v1901
    %1965 = vst.msk [vmem:[%s6 + $0x28] sm:$0xff] %vm1959, %v1906
    %1966 = vst.msk [vmem:[%s6 + $0x30] sm:$0xff] %vm1959, %v1911
    %1967 = vst.msk [vmem:[%s6 + $0x38] sm:$0xff] %vm1959, %v1916
    %1968 = vst.msk [vmem:[%s6 + $0x40] sm:$0xff] %vm1959, %v1921
    %1969 = vst.msk [vmem:[%s6 + $0x48] sm:$0xff] %vm1959, %v1926
    %1970 = vst.msk [vmem:[%s6 + $0x50] sm:$0xff] %vm1959, %v1931
    %1971 = vst.msk [vmem:[%s6 + $0x58] sm:$0xff] %vm1959, %v1936
    %1972 = vst.msk [vmem:[%s6 + $0x60] sm:$0xff] %vm1959, %v1941
    %1973 = vst.msk [vmem:[%s6 + $0x68] sm:$0xff] %vm1959, %v1946
    %1974 = vst.msk [vmem:[%s6 + $0x70] sm:$0xff] %vm1959, %v1951
    %1975 = vst.msk [vmem:[%s6 + $0x78] sm:$0xff] %vm1959, %v1956
    // Predicated region
    $region26: #{tpu_custom_call.1} parent=1 // pred_check
      _
    $region27: #{tpu_custom_call.1} parent=1 // pred_check_branch
      %1977 = sbr.rel (0) target = $region29
    $region28: #{tpu_custom_call.1} parent=1 // pred_region
      _
    $region29: #{tpu_custom_call.1} parent=1 // pred_fallthru
      _
    // Predicated region
    $region30: #{tpu_custom_call.1} parent=1 // pred_check
      _
    $region31: #{tpu_custom_call.1} parent=1 // pred_check_branch
      %1979 = sbr.rel (0) target = $region33
    $region32: #{tpu_custom_call.1} parent=1 // pred_region
      %s1981 = ssub.s32 256, 256
      %1982 = vsyncadd [#allocation3], %s1981
      %s1983 = sshll.u32 [#allocation2], 4
      %s1984 = int_to_ptr.vmem [resolvable:$true] %s1983
      %1989 = dma.vmem_to_hbm [thread:$0]  %s1984, 256, %s7, [#allocation3], 128, 128, 8
    $region33: #{tpu_custom_call.1} parent=1 // pred_fallthru
      _
    // Predicated region
    $region34: #{tpu_custom_call.1} parent=1 // pred_check
      _
    $region35: #{tpu_custom_call.1} parent=1 // pred_check_branch
      %1991 = sbr.rel (0) target = $region37
    $region36: #{tpu_custom_call.1} parent=1 // pred_region
      _
    $region37: #{tpu_custom_call.1} parent=1 // pred_fallthru
      _
    // Predicated region
    $region38: #{tpu_custom_call.1} parent=1 // pred_check
      _
    $region39: #{tpu_custom_call.1} parent=1 // pred_check_branch
      %1993 = sbr.rel (0) target = $region41
    $region40: #{tpu_custom_call.1} parent=1 // pred_region
      %1994 = dma.done [#allocation3], 256
    $region41: #{tpu_custom_call.1} parent=1 // pred_fallthru
      _
    %1995 = vsyncpa [#allocation3], 1

</llo_original>
